<compile_context>
chip_gen: v7x
topology: tpu7x:2x2x1
jax: 0.10.0
libtpu: 0.0.40
codegen_flags: <defaults>
</compile_context>

<pallas_src>
import jax
import jax.numpy as jnp
from jax.experimental import pallas as pl
from jax.experimental.pallas import tpu as pltpu


IN_FEATURES = 28 * 28   # 784
HIDDEN = 512
OUT_FEATURES = 10
OUT_PAD = 128           # lane-dense output tile (sliced back to 10 in wrapper)
K_LAYOUT = 896          # 784 rounded up to the lane multiple Mosaic uses internally


def _round_up(n, m):
    return ((n + m - 1) // m) * m


def mlp_kernel(x_ref, w1_ref, b1_ref, w2_ref, b2_ref, w3_ref, b3_ref, o_ref):
    """Fused 3-layer MLP on one (block_b, 784) batch tile.

    Weights/biases are VMEM-resident across grid steps; only the x tile and the
    (block_b, OUT_PAD) output tile stream through HBM (double-buffered by the
    Pallas pipeline).  Matmuls accumulate in f32 on the MXU; bias-add and ReLU
    run in f32 on the VPU.  The x cast to the compute dtype happens here (VPU,
    cheap) so no extra HBM pass is spent on it outside the kernel.
    """
    x = x_ref[...].astype(w1_ref.dtype)                                     # (TB, 784)
    h1 = jnp.dot(x, w1_ref[...], preferred_element_type=jnp.float32)        # (TB, 512)
    h1 = jnp.maximum(h1 + b1_ref[...], 0.0)
    h2 = jnp.dot(h1.astype(w2_ref.dtype), w2_ref[...],
                 preferred_element_type=jnp.float32)                        # (TB, 512)
    h2 = jnp.maximum(h2 + b2_ref[...], 0.0)
    logits = jnp.dot(h2.astype(w3_ref.dtype), w3_ref[...],
                     preferred_element_type=jnp.float32)                     # (TB, 128)
    o_ref[...] = logits + b3_ref[...]


def _vmem_limit_bytes(block_b, x_itemsize, w_itemsize):
    """Budget actual VMEM usage (double-buffered tiles + resident params)."""
    x_bufs = 2 * block_b * K_LAYOUT * x_itemsize
    out_bufs = 2 * block_b * OUT_PAD * 4
    weights = 2 * (K_LAYOUT * HIDDEN + HIDDEN * HIDDEN + HIDDEN * OUT_PAD) * w_itemsize
    biases = 2 * 8 * (2 * HIDDEN + OUT_PAD) * 4          # (1,n) rows pad to 8 sublanes
    acts = 2 * block_b * HIDDEN * 4                      # h1/h2 in f32
    need = x_bufs + out_bufs + weights + biases + acts
    # 1.5x + 4 MiB headroom for Mosaic-internal scratch; cap below v7x's 64 MiB.
    return min(int(need * 1.5) + (4 << 20), 48 << 20)


def prepare_params(torch_params, weight_dtype=jnp.bfloat16):
    """One-time conversion of torch-layout params into kernel layout.

    torch layout: weight (out_features, in_features), bias (out_features,).
    kernel layout: weight (in, out) in weight_dtype, bias (1, out) in f32,
    final layer padded to a lane-dense 128-wide output.
    """
    pad3 = OUT_PAD - OUT_FEATURES
    return {
        "w1": torch_params["w1"].T.astype(weight_dtype),
        "b1": torch_params["b1"].reshape(1, HIDDEN).astype(jnp.float32),
        "w2": torch_params["w2"].T.astype(weight_dtype),
        "b2": torch_params["b2"].reshape(1, HIDDEN).astype(jnp.float32),
        "w3": jnp.pad(torch_params["w3"].T, ((0, 0), (0, pad3))).astype(weight_dtype),
        "b3": jnp.pad(torch_params["b3"].reshape(1, OUT_FEATURES),
                      ((0, 0), (0, pad3))).astype(jnp.float32),
    }


def neural_network_forward(x_nchw, prepared, *, block_b=None):
    """Forward pass matching the PyTorch NeuralNetwork module.

    x_nchw: (B, 1, 28, 28) array (f32 or bf16; cast to compute dtype in-kernel).
    prepared: output of prepare_params().
    Returns logits of shape (B, 10), float32.
    """
    B = x_nchw.shape[0]
    x_flat = x_nchw.reshape(B, -1)            # nn.Flatten(start_dim=1)
    assert x_flat.shape[1] == IN_FEATURES

    # --- batch tiling -----------------------------------------------------
    if block_b is None:
        block_b = min(1024, _round_up(max(B, 1), 8))
        if B > 8:
            # >= 2 grid steps so both v7x TensorCores get work; harmless on
            # single-TC v5e/v6e (one extra ~0.35 us grid step).
            block_b = min(block_b, _round_up(pl.cdiv(B, 2), 8))
    block_b = max(8, _round_up(block_b, 8))
    grid = (pl.cdiv(B, block_b),)             # partial last block is clipped

    w1, b1 = prepared["w1"], prepared["b1"]
    w2, b2 = prepared["w2"], prepared["b2"]
    w3, b3 = prepared["w3"], prepared["b3"]

    x_itemsize = jnp.dtype(x_flat.dtype).itemsize
    w_itemsize = jnp.dtype(w1.dtype).itemsize

    # --- BlockSpecs: x/out streamed per grid step, params resident ---------
    def resident(shape):
        # Constant block index: DMA'd once, stays VMEM-resident across steps.
        return pl.BlockSpec(shape, lambda i: (0, 0))

    in_specs = [
        pl.BlockSpec((block_b, IN_FEATURES), lambda i: (i, 0)),   # x (streamed)
        resident((IN_FEATURES, HIDDEN)),                          # w1
        resident((1, HIDDEN)),                                    # b1
        resident((HIDDEN, HIDDEN)),                               # w2
        resident((1, HIDDEN)),                                    # b2
        resident((HIDDEN, OUT_PAD)),                              # w3
        resident((1, OUT_PAD)),                                   # b3
    ]
    out_spec = pl.BlockSpec((block_b, OUT_PAD), lambda i: (i, 0))

    weight_bytes = (IN_FEATURES * HIDDEN + HIDDEN * HIDDEN
                    + HIDDEN * OUT_PAD) * w_itemsize
    cost = pl.CostEstimate(
        flops=2 * B * (IN_FEATURES * HIDDEN + HIDDEN * HIDDEN
                       + HIDDEN * OUT_FEATURES),
        transcendentals=0,
        bytes_accessed=(weight_bytes
                        + B * IN_FEATURES * x_itemsize     # x (no pad traffic)
                        + B * OUT_PAD * 4),                # out (f32)
    )

    out_padded = pl.pallas_call(
        mlp_kernel,
        out_shape=jax.ShapeDtypeStruct((B, OUT_PAD), jnp.float32),
        grid=grid,
        in_specs=in_specs,
        out_specs=out_spec,
        compiler_params=pltpu.CompilerParams(
            dimension_semantics=("parallel",),
            vmem_limit_bytes=_vmem_limit_bytes(block_b, x_itemsize, w_itemsize),
        ),
        cost_estimate=cost,
    )(x_flat, w1, b1, w2, b2, w3, b3)

    return out_padded[:, :OUT_FEATURES]


def init_params(key):
    """Deterministic torch-layout parameter init (shapes from the module)."""
    k1, k2, k3, k4, k5, k6 = jax.random.split(key, 6)

    def uniform_init(k, shape, fan_in):
        bound = 1.0 / jnp.sqrt(float(fan_in))
        return jax.random.uniform(k, shape, jnp.float32, -bound, bound)

    return {
        "w1": uniform_init(k1, (HIDDEN, IN_FEATURES), IN_FEATURES),
        "b1": uniform_init(k2, (HIDDEN,), IN_FEATURES),
        "w2": uniform_init(k3, (HIDDEN, HIDDEN), HIDDEN),
        "b2": uniform_init(k4, (HIDDEN,), HIDDEN),
        "w3": uniform_init(k5, (OUT_FEATURES, HIDDEN), HIDDEN),
        "b3": uniform_init(k6, (OUT_FEATURES,), HIDDEN),
    }


def _reference(x_nchw, p):
    xf = x_nchw.reshape(x_nchw.shape[0], -1)
    h1 = jnp.maximum(xf @ p["w1"].T + p["b1"], 0.0)
    h2 = jnp.maximum(h1 @ p["w2"].T + p["b2"], 0.0)
    return h2 @ p["w3"].T + p["b3"]


if __name__ == "__main__":
    key = jax.random.PRNGKey(0)
    k_params, k_x = jax.random.split(key)
    torch_params = init_params(k_params)

    # 1) Exact f32 path, tiny batch (single partial grid block).
    prep_f32 = prepare_params(torch_params, weight_dtype=jnp.float32)
    B = 4
    x = jax.random.normal(k_x, (B, 1, 28, 28), dtype=jnp.float32)  # NCHW
    logits = jax.block_until_ready(neural_network_forward(x, prep_f32))
    ref = _reference(x, torch_params)
    assert logits.shape == (B, OUT_FEATURES)
    assert jnp.allclose(logits, ref, atol=1e-4, rtol=1e-4)

    # 2) Default bf16-storage path (f32 accumulation), non-multiple batch that
    #    exercises grid > 1 with a partial last block and megacore sharding.
    prep_bf16 = prepare_params(torch_params)          # weight_dtype = bfloat16
    B2 = 260
    x2 = jax.random.normal(k_x, (B2, 1, 28, 28), dtype=jnp.float32)
    logits2 = jax.block_until_ready(neural_network_forward(x2, prep_bf16))
    ref2 = _reference(x2, torch_params)
    assert logits2.shape == (B2, OUT_FEATURES)
    assert jnp.allclose(logits2, ref2, atol=5e-2, rtol=5e-2)

    print("KERNEL_OK")
</pallas_src>

<mosaic_0001>
module attributes {stable_mosaic.version = 11 : i64} {
  func.func @mlp_kernel(%arg0: i32, %arg1: memref<8x784xf32, #tpu.memory_space<vmem>>, %arg2: memref<784x512xf32, #tpu.memory_space<vmem>>, %arg3: memref<1x512xf32, #tpu.memory_space<vmem>>, %arg4: memref<512x512xf32, #tpu.memory_space<vmem>>, %arg5: memref<1x512xf32, #tpu.memory_space<vmem>>, %arg6: memref<512x128xf32, #tpu.memory_space<vmem>>, %arg7: memref<1x128xf32, #tpu.memory_space<vmem>>, %arg8: memref<8x128xf32, #tpu.memory_space<vmem>>) attributes {dimension_semantics = [#tpu.dimension_semantics<parallel>], iteration_bounds = array<i64: 1>, scalar_prefetch = 0 : i64, scratch_operands = 0 : i64, tpu.core_type = #tpu.core_type<tc>, window_params = [{transform_indices = @transform_0, window_bounds = array<i64: 8, 784>}, {pipeline_mode = #tpu.pipeline_mode<synchronous>, transform_indices = @transform_1, window_bounds = array<i64: 784, 512>}, {pipeline_mode = #tpu.pipeline_mode<synchronous>, transform_indices = @transform_2, window_bounds = array<i64: 1, 512>}, {pipeline_mode = #tpu.pipeline_mode<synchronous>, transform_indices = @transform_3, window_bounds = array<i64: 512, 512>}, {pipeline_mode = #tpu.pipeline_mode<synchronous>, transform_indices = @transform_4, window_bounds = array<i64: 1, 512>}, {pipeline_mode = #tpu.pipeline_mode<synchronous>, transform_indices = @transform_5, window_bounds = array<i64: 512, 128>}, {pipeline_mode = #tpu.pipeline_mode<synchronous>, transform_indices = @transform_6, window_bounds = array<i64: 1, 128>}, {transform_indices = @transform_7, window_bounds = array<i64: 8, 128>}]} {
    %c0 = arith.constant 0 : index
    %c0_0 = arith.constant 0 : index
    %0 = vector.load %arg1[%c0, %c0_0] : memref<8x784xf32, #tpu.memory_space<vmem>>, vector<8x784xf32>
    %c0_1 = arith.constant 0 : index
    %c0_2 = arith.constant 0 : index
    %1 = vector.load %arg2[%c0_1, %c0_2] : memref<784x512xf32, #tpu.memory_space<vmem>>, vector<784x512xf32>
    %cst = arith.constant dense<0.000000e+00> : vector<8x512xf32>
    %2 = tpu.matmul %0, %1, %cst {dimension_numbers = #tpu.dot_dimension_numbers<[1], [0], [0], [1], [0, 0, 1, 1], [], []>} : vector<8x784xf32>, vector<784x512xf32>, vector<8x512xf32> -> vector<8x512xf32>
    %c0_3 = arith.constant 0 : index
    %c0_4 = arith.constant 0 : index
    %3 = vector.load %arg3[%c0_3, %c0_4] : memref<1x512xf32, #tpu.memory_space<vmem>>, vector<1x512xf32>
    %4 = vector.broadcast %3 : vector<1x512xf32> to vector<8x512xf32>
    %5 = arith.addf %2, %4 : vector<8x512xf32>
    %cst_5 = arith.constant 0.000000e+00 : f32
    %6 = vector.broadcast %cst_5 : f32 to vector<8x512xf32>
    %7 = arith.maximumf %5, %6 : vector<8x512xf32>
    %c0_6 = arith.constant 0 : index
    %c0_7 = arith.constant 0 : index
    %8 = vector.load %arg4[%c0_6, %c0_7] : memref<512x512xf32, #tpu.memory_space<vmem>>, vector<512x512xf32>
    %cst_8 = arith.constant dense<0.000000e+00> : vector<8x512xf32>
    %9 = tpu.matmul %7, %8, %cst_8 {dimension_numbers = #tpu.dot_dimension_numbers<[1], [0], [0], [1], [0, 0, 1, 1], [], []>} : vector<8x512xf32>, vector<512x512xf32>, vector<8x512xf32> -> vector<8x512xf32>
    %c0_9 = arith.constant 0 : index
    %c0_10 = arith.constant 0 : index
    %10 = vector.load %arg5[%c0_9, %c0_10] : memref<1x512xf32, #tpu.memory_space<vmem>>, vector<1x512xf32>
    %11 = vector.broadcast %10 : vector<1x512xf32> to vector<8x512xf32>
    %12 = arith.addf %9, %11 : vector<8x512xf32>
    %cst_11 = arith.constant 0.000000e+00 : f32
    %13 = vector.broadcast %cst_11 : f32 to vector<8x512xf32>
    %14 = arith.maximumf %12, %13 : vector<8x512xf32>
    %c0_12 = arith.constant 0 : index
    %c0_13 = arith.constant 0 : index
    %15 = vector.load %arg6[%c0_12, %c0_13] : memref<512x128xf32, #tpu.memory_space<vmem>>, vector<512x128xf32>
    %cst_14 = arith.constant dense<0.000000e+00> : vector<8x128xf32>
    %16 = tpu.matmul %14, %15, %cst_14 {dimension_numbers = #tpu.dot_dimension_numbers<[1], [0], [0], [1], [0, 0, 1, 1], [], []>} : vector<8x512xf32>, vector<512x128xf32>, vector<8x128xf32> -> vector<8x128xf32>
    %c0_15 = arith.constant 0 : index
    %c0_16 = arith.constant 0 : index
    %17 = vector.load %arg7[%c0_15, %c0_16] : memref<1x128xf32, #tpu.memory_space<vmem>>, vector<1x128xf32>
    %18 = vector.broadcast %17 : vector<1x128xf32> to vector<8x128xf32>
    %19 = arith.addf %16, %18 : vector<8x128xf32>
    %c0_17 = arith.constant 0 : index
    %c0_18 = arith.constant 0 : index
    %20 = vector.load %arg8[%c0_17, %c0_18] : memref<8x128xf32, #tpu.memory_space<vmem>>, vector<8x128xf32>
    tpu.vector_store %arg8[%c0_17, %c0_18], %19 {strides = array<i32>} : memref<8x128xf32, #tpu.memory_space<vmem>>, vector<8x128xf32>,
    return
  }
  func.func @transform_0(%arg0: i32) -> (i32, i32) {
    %c0_i32 = arith.constant 0 : i32
    %c0_i32_0 = arith.constant 0 : i32
    return %arg0, %c0_i32 : i32, i32
  }
  func.func @transform_1(%arg0: i32) -> (i32, i32) {
    %c0_i32 = arith.constant 0 : i32
    %c0_i32_0 = arith.constant 0 : i32
    %c0_i32_1 = arith.constant 0 : i32
    return %c0_i32, %c0_i32_0 : i32, i32
  }
  func.func @transform_2(%arg0: i32) -> (i32, i32) {
    %c0_i32 = arith.constant 0 : i32
    %c0_i32_0 = arith.constant 0 : i32
    %c0_i32_1 = arith.constant 0 : i32
    return %c0_i32, %c0_i32_0 : i32, i32
  }
  func.func @transform_3(%arg0: i32) -> (i32, i32) {
    %c0_i32 = arith.constant 0 : i32
    %c0_i32_0 = arith.constant 0 : i32
    %c0_i32_1 = arith.constant 0 : i32
    return %c0_i32, %c0_i32_0 : i32, i32
  }
  func.func @transform_4(%arg0: i32) -> (i32, i32) {
    %c0_i32 = arith.constant 0 : i32
    %c0_i32_0 = arith.constant 0 : i32
    %c0_i32_1 = arith.constant 0 : i32
    return %c0_i32, %c0_i32_0 : i32, i32
  }
  func.func @transform_5(%arg0: i32) -> (i32, i32) {
    %c0_i32 = arith.constant 0 : i32
    %c0_i32_0 = arith.constant 0 : i32
    %c0_i32_1 = arith.constant 0 : i32
    return %c0_i32, %c0_i32_0 : i32, i32
  }
  func.func @transform_6(%arg0: i32) -> (i32, i32) {
    %c0_i32 = arith.constant 0 : i32
    %c0_i32_0 = arith.constant 0 : i32
    %c0_i32_1 = arith.constant 0 : i32
    return %c0_i32, %c0_i32_0 : i32, i32
  }
  func.func @transform_7(%arg0: i32) -> (i32, i32) {
    %c0_i32 = arith.constant 0 : i32
    %c0_i32_0 = arith.constant 0 : i32
    return %arg0, %c0_i32 : i32, i32
  }
}

</mosaic_0001>

<llo_original>
// kernel: tpu_custom_call.1
$region0: #{tpu_custom_call.1}
  #allocation0 [shape = 'u32[]', space=smem, size = 0x4, offset = 0x4, fixed_abs, tag = 'smem constant byte address 0x4 - core index']
  #allocation1 [shape = 'u32[144,128]{1,0:T(1,128)}', space=vmem, size = 0x12000, scoped, tag = 'internal scratch']
  %s0 = inlined_call_operand.hbm [shape: f32[4,784], index: 0, kind: input, shape index: {}]
  %s1 = inlined_call_operand.hbm [shape: f32[784,512], index: 1, kind: input, shape index: {}]
  %s2 = inlined_call_operand.hbm [shape: f32[1,512], index: 2, kind: input, shape index: {}]
  %s3 = inlined_call_operand.hbm [shape: f32[512,512], index: 3, kind: input, shape index: {}]
  %s4 = inlined_call_operand.hbm [shape: f32[1,512], index: 4, kind: input, shape index: {}]
  %s5 = inlined_call_operand.hbm [shape: f32[512,128], index: 5, kind: input, shape index: {}]
  %s6 = inlined_call_operand.hbm [shape: f32[1,128], index: 6, kind: input, shape index: {}]
  %s7 = inlined_call_operand.hbm [shape: f32[4,128], index: 7, kind: output, shape index: {}]
  %s8 = sld [smem:[#allocation0]]
  $region66: #{tpu_custom_call.1} parent=0
    _
  %s10 = ssub.s32 1, %s8
  %s11 = scalar_select 0, %s10, %s8
  $region1: #{tpu_custom_call.1} parent=0
    #allocation2 [shape = 'u8[28672]{0}', space=vmem, size = 0x7000, scoped, tag = 'input window, operand 0, single buffered']
    #allocation3 [shape = 's32[1]{0}', space=sflag, size = 0x4, scoped, tag = 'scoped memory for tpu_custom_call.1']
    #allocation4 [shape = 's32[1]{0}', space=sflag, size = 0x4, scoped, tag = 'scoped memory for tpu_custom_call.1']
    #allocation5 [shape = 'u8[1605632]{0}', space=vmem, size = 0x188000, scoped, tag = 'input window, operand 1, single buffered']
    #allocation6 [shape = 's32[1]{0}', space=sflag, size = 0x4, scoped, tag = 'scoped memory for tpu_custom_call.1']
    #allocation7 [shape = 'u8[2048]{0}', space=vmem, size = 0x800, scoped, tag = 'input window, operand 2, single buffered']
    #allocation8 [shape = 'u8[1048576]{0}', space=vmem, size = 0x100000, scoped, tag = 'input window, operand 3, single buffered']
    #allocation9 [shape = 's32[1]{0}', space=sflag, size = 0x4, scoped, tag = 'scoped memory for tpu_custom_call.1']
    #allocation10 [shape = 'u8[2048]{0}', space=vmem, size = 0x800, scoped, tag = 'input window, operand 4, single buffered']
    #allocation11 [shape = 'u8[262144]{0}', space=vmem, size = 0x40000, scoped, tag = 'input window, operand 5, single buffered']
    #allocation12 [shape = 's32[1]{0}', space=sflag, size = 0x4, scoped, tag = 'scoped memory for tpu_custom_call.1']
    #allocation13 [shape = 'u8[512]{0}', space=vmem, size = 0x400, scoped, tag = 'input window, operand 6, single buffered']
    #allocation14 [shape = 'u8[4096]{0}', space=vmem, size = 0x1000, scoped, tag = 'output window, operand 0, single buffered']
    %12 = vsyncpa [#allocation3], 0
    %13 = vsyncpa [#allocation6], 0
    %14 = vsyncpa [#allocation9], 0
    %15 = vsyncpa [#allocation12], 0
    %16 = vsyncpa [#allocation4], 0
    // Predicated region
    $region2: #{tpu_custom_call.1} parent=1 // pred_check
      _
    $region3: #{tpu_custom_call.1} parent=1 // pred_check_branch
      %18 = sbr.rel (0) target = $region5
    $region4: #{tpu_custom_call.1} parent=1 // pred_region
      %s20 = ssub.s32 896, 448
      %21 = vsyncadd [#allocation3], %s20
      %s22 = sshll.u32 [#allocation2], 4
      %s23 = int_to_ptr.vmem [resolvable:$true] %s22
      %28 = dma.hbm_to_vmem [thread:$0]  %s0, 448, %s23, [#allocation3], 448, 448, 28
    $region5: #{tpu_custom_call.1} parent=1 // pred_fallthru
      _
    // Predicated region
    $region6: #{tpu_custom_call.1} parent=1 // pred_check
      _
    $region7: #{tpu_custom_call.1} parent=1 // pred_check_branch
      %30 = sbr.rel (0) target = $region9
    $region8: #{tpu_custom_call.1} parent=1 // pred_region
      %s32 = ssub.s32 50176, 50176
      %33 = vsyncadd [#allocation6], %s32
      %s34 = sshll.u32 [#allocation5], 4
      %s35 = int_to_ptr.vmem [resolvable:$true] %s34
      %40 = dma.hbm_to_vmem [thread:$0]  %s1, 50176, %s35, [#allocation6], 512, 512, 32
    $region9: #{tpu_custom_call.1} parent=1 // pred_fallthru
      _
    // Predicated region
    $region10: #{tpu_custom_call.1} parent=1 // pred_check
      _
    $region11: #{tpu_custom_call.1} parent=1 // pred_check_branch
      %42 = sbr.rel (0) target = $region13
    $region12: #{tpu_custom_call.1} parent=1 // pred_region
      %s44 = ssub.s32 64, 64
      %45 = vsyncadd [#allocation6], %s44
      %s47 = sshll.u32 [#allocation7], 4
      %s48 = int_to_ptr.vmem [resolvable:$true] %s47
      %50 = dma.hbm_to_vmem [thread:$0]  %s2, 64, %s48, [#allocation6]
    $region13: #{tpu_custom_call.1} parent=1 // pred_fallthru
      _
    // Predicated region
    $region14: #{tpu_custom_call.1} parent=1 // pred_check
      _
    $region15: #{tpu_custom_call.1} parent=1 // pred_check_branch
      %52 = sbr.rel (0) target = $region17
    $region16: #{tpu_custom_call.1} parent=1 // pred_region
      %s54 = ssub.s32 32768, 32768
      %55 = vsyncadd [#allocation9], %s54
      %s56 = sshll.u32 [#allocation8], 4
      %s57 = int_to_ptr.vmem [resolvable:$true] %s56
      %62 = dma.hbm_to_vmem [thread:$0]  %s3, 32768, %s57, [#allocation9], 512, 512, 32
    $region17: #{tpu_custom_call.1} parent=1 // pred_fallthru
      _
    // Predicated region
    $region18: #{tpu_custom_call.1} parent=1 // pred_check
      _
    $region19: #{tpu_custom_call.1} parent=1 // pred_check_branch
      %64 = sbr.rel (0) target = $region21
    $region20: #{tpu_custom_call.1} parent=1 // pred_region
      %s66 = ssub.s32 64, 64
      %67 = vsyncadd [#allocation9], %s66
      %s69 = sshll.u32 [#allocation10], 4
      %s70 = int_to_ptr.vmem [resolvable:$true] %s69
      %72 = dma.hbm_to_vmem [thread:$0]  %s4, 64, %s70, [#allocation9]
    $region21: #{tpu_custom_call.1} parent=1 // pred_fallthru
      _
    // Predicated region
    $region22: #{tpu_custom_call.1} parent=1 // pred_check
      _
    $region23: #{tpu_custom_call.1} parent=1 // pred_check_branch
      %74 = sbr.rel (0) target = $region25
    $region24: #{tpu_custom_call.1} parent=1 // pred_region
      %s76 = ssub.s32 8192, 8192
      %77 = vsyncadd [#allocation12], %s76
      %s78 = sshll.u32 [#allocation11], 4
      %s79 = int_to_ptr.vmem [resolvable:$true] %s78
      %84 = dma.hbm_to_vmem [thread:$0]  %s5, 8192, %s79, [#allocation12], 128, 128, 8
    $region25: #{tpu_custom_call.1} parent=1 // pred_fallthru
      _
    // Predicated region
    $region26: #{tpu_custom_call.1} parent=1 // pred_check
      _
    $region27: #{tpu_custom_call.1} parent=1 // pred_check_branch
      %86 = sbr.rel (0) target = $region29
    $region28: #{tpu_custom_call.1} parent=1 // pred_region
      %s88 = ssub.s32 16, 16
      %89 = vsyncadd [#allocation12], %s88
      %s91 = sshll.u32 [#allocation13], 4
      %s92 = int_to_ptr.vmem [resolvable:$true] %s91
      %94 = dma.hbm_to_vmem [thread:$0]  %s6, 16, %s92, [#allocation12]
    $region29: #{tpu_custom_call.1} parent=1 // pred_fallthru
      _
    // Predicated region
    $region30: #{tpu_custom_call.1} parent=1 // pred_check
      _
    $region31: #{tpu_custom_call.1} parent=1 // pred_check_branch
      %96 = sbr.rel (0) target = $region33
    $region32: #{tpu_custom_call.1} parent=1 // pred_region
      %97 = dma.done [#allocation3], 896
    $region33: #{tpu_custom_call.1} parent=1 // pred_fallthru
      _
    // Predicated region
    $region34: #{tpu_custom_call.1} parent=1 // pred_check
      _
    $region35: #{tpu_custom_call.1} parent=1 // pred_check_branch
      %99 = sbr.rel (0) target = $region37
    $region36: #{tpu_custom_call.1} parent=1 // pred_region
      %100 = dma.done [#allocation6], 50176
    $region37: #{tpu_custom_call.1} parent=1 // pred_fallthru
      _
    // Predicated region
    $region38: #{tpu_custom_call.1} parent=1 // pred_check
      _
    $region39: #{tpu_custom_call.1} parent=1 // pred_check_branch
      %102 = sbr.rel (0) target = $region41
    $region40: #{tpu_custom_call.1} parent=1 // pred_region
      %103 = dma.done [#allocation6], 64
    $region41: #{tpu_custom_call.1} parent=1 // pred_fallthru
      _
    // Predicated region
    $region42: #{tpu_custom_call.1} parent=1 // pred_check
      _
    $region43: #{tpu_custom_call.1} parent=1 // pred_check_branch
      %105 = sbr.rel (0) target = $region45
    $region44: #{tpu_custom_call.1} parent=1 // pred_region
      %106 = dma.done [#allocation9], 32768
    $region45: #{tpu_custom_call.1} parent=1 // pred_fallthru
      _
    // Predicated region
    $region46: #{tpu_custom_call.1} parent=1 // pred_check
      _
    $region47: #{tpu_custom_call.1} parent=1 // pred_check_branch
      %108 = sbr.rel (0) target = $region49
    $region48: #{tpu_custom_call.1} parent=1 // pred_region
      %109 = dma.done [#allocation9], 64
    $region49: #{tpu_custom_call.1} parent=1 // pred_fallthru
      _
    // Predicated region
    $region50: #{tpu_custom_call.1} parent=1 // pred_check
      _
    $region51: #{tpu_custom_call.1} parent=1 // pred_check_branch
      %111 = sbr.rel (0) target = $region53
    $region52: #{tpu_custom_call.1} parent=1 // pred_region
      %112 = dma.done [#allocation12], 8192
    $region53: #{tpu_custom_call.1} parent=1 // pred_fallthru
      _
    // Predicated region
    $region54: #{tpu_custom_call.1} parent=1 // pred_check
      _
    $region55: #{tpu_custom_call.1} parent=1 // pred_check_branch
      %114 = sbr.rel (0) target = $region57
    $region56: #{tpu_custom_call.1} parent=1 // pred_region
      %115 = dma.done [#allocation12], 16
    $region57: #{tpu_custom_call.1} parent=1 // pred_fallthru
      _
    %v116 = vld [vmem:[#allocation2] sm:$0xff]
    %v117 = vld [vmem:[#allocation2 + $0x8] sm:$0xff]
    %v118 = vld [vmem:[#allocation2 + $0x10] sm:$0xff]
    %v119 = vld [vmem:[#allocation2 + $0x18] sm:$0xf]
    %v120 = vld [vmem:[#allocation2 + $0x1c] sm:$0xff]
    %v121 = vld [vmem:[#allocation2 + $0x24] sm:$0xff]
    %v122 = vld [vmem:[#allocation2 + $0x2c] sm:$0xff]
    %v123 = vld [vmem:[#allocation2 + $0x34] sm:$0xf]
    %v124 = vld [vmem:[#allocation5] sm:$0xff]
    %v125 = vld [vmem:[#allocation5 + $0x8] sm:$0xff]
    %v126 = vld [vmem:[#allocation5 + $0x10] sm:$0xff]
    %v127 = vld [vmem:[#allocation5 + $0x18] sm:$0xff]
    %v128 = vld [vmem:[#allocation5 + $0x20] sm:$0xff]
    %v129 = vld [vmem:[#allocation5 + $0x28] sm:$0xff]
    %v130 = vld [vmem:[#allocation5 + $0x30] sm:$0xff]
    %v131 = vld [vmem:[#allocation5 + $0x38] sm:$0xff]
    %v132 = vld [vmem:[#allocation5 + $0x40] sm:$0xff]
    %v133 = vld [vmem:[#allocation5 + $0x48] sm:$0xff]
    %v134 = vld [vmem:[#allocation5 + $0x50] sm:$0xff]
    %v135 = vld [vmem:[#allocation5 + $0x58] sm:$0xff]
    %v136 = vld [vmem:[#allocation5 + $0x60] sm:$0xff]
    %v137 = vld [vmem:[#allocation5 + $0x68] sm:$0xff]
    %v138 = vld [vmem:[#allocation5 + $0x70] sm:$0xff]
    %v139 = vld [vmem:[#allocation5 + $0x78] sm:$0xff]
    %v140 = vld [vmem:[#allocation5 + $0x80] sm:$0xff]
    %v141 = vld [vmem:[#allocation5 + $0x88] sm:$0xff]
    %v142 = vld [vmem:[#allocation5 + $0x90] sm:$0xff]
    %v143 = vld [vmem:[#allocation5 + $0x98] sm:$0xff]
    %v144 = vld [vmem:[#allocation5 + $0xa0] sm:$0xff]
    %v145 = vld [vmem:[#allocation5 + $0xa8] sm:$0xff]
    %v146 = vld [vmem:[#allocation5 + $0xb0] sm:$0xff]
    %v147 = vld [vmem:[#allocation5 + $0xb8] sm:$0xff]
    %v148 = vld [vmem:[#allocation5 + $0xc0] sm:$0xff]
    %v149 = vld [vmem:[#allocation5 + $0xc8] sm:$0xff]
    %v150 = vld [vmem:[#allocation5 + $0xd0] sm:$0xff]
    %v151 = vld [vmem:[#allocation5 + $0xd8] sm:$0xff]
    %v152 = vld [vmem:[#allocation5 + $0xe0] sm:$0xff]
    %v153 = vld [vmem:[#allocation5 + $0xe8] sm:$0xff]
    %v154 = vld [vmem:[#allocation5 + $0xf0] sm:$0xff]
    %v155 = vld [vmem:[#allocation5 + $0xf8] sm:$0xff]
    %v156 = vld [vmem:[#allocation5 + $0x100] sm:$0xff]
    %v157 = vld [vmem:[#allocation5 + $0x108] sm:$0xff]
    %v158 = vld [vmem:[#allocation5 + $0x110] sm:$0xff]
    %v159 = vld [vmem:[#allocation5 + $0x118] sm:$0xff]
    %v160 = vld [vmem:[#allocation5 + $0x120] sm:$0xff]
    %v161 = vld [vmem:[#allocation5 + $0x128] sm:$0xff]
    %v162 = vld [vmem:[#allocation5 + $0x130] sm:$0xff]
    %v163 = vld [vmem:[#allocation5 + $0x138] sm:$0xff]
    %v164 = vld [vmem:[#allocation5 + $0x140] sm:$0xff]
    %v165 = vld [vmem:[#allocation5 + $0x148] sm:$0xff]
    %v166 = vld [vmem:[#allocation5 + $0x150] sm:$0xff]
    %v167 = vld [vmem:[#allocation5 + $0x158] sm:$0xff]
    %v168 = vld [vmem:[#allocation5 + $0x160] sm:$0xff]
    %v169 = vld [vmem:[#allocation5 + $0x168] sm:$0xff]
    %v170 = vld [vmem:[#allocation5 + $0x170] sm:$0xff]
    %v171 = vld [vmem:[#allocation5 + $0x178] sm:$0xff]
    %v172 = vld [vmem:[#allocation5 + $0x180] sm:$0xff]
    %v173 = vld [vmem:[#allocation5 + $0x188] sm:$0xff]
    %v174 = vld [vmem:[#allocation5 + $0x190] sm:$0xff]
    %v175 = vld [vmem:[#allocation5 + $0x198] sm:$0xff]
    %v176 = vld [vmem:[#allocation5 + $0x1a0] sm:$0xff]
    %v177 = vld [vmem:[#allocation5 + $0x1a8] sm:$0xff]
    %v178 = vld [vmem:[#allocation5 + $0x1b0] sm:$0xff]
    %v179 = vld [vmem:[#allocation5 + $0x1b8] sm:$0xff]
    %v180 = vld [vmem:[#allocation5 + $0x1c0] sm:$0xff]
    %v181 = vld [vmem:[#allocation5 + $0x1c8] sm:$0xff]
    %v182 = vld [vmem:[#allocation5 + $0x1d0] sm:$0xff]
    %v183 = vld [vmem:[#allocation5 + $0x1d8] sm:$0xff]
    %v184 = vld [vmem:[#allocation5 + $0x1e0] sm:$0xff]
    %v185 = vld [vmem:[#allocation5 + $0x1e8] sm:$0xff]
    %v186 = vld [vmem:[#allocation5 + $0x1f0] sm:$0xff]
    %v187 = vld [vmem:[#allocation5 + $0x1f8] sm:$0xff]
    %v188 = vld [vmem:[#allocation5 + $0x200] sm:$0xff]
    %v189 = vld [vmem:[#allocation5 + $0x208] sm:$0xff]
    %v190 = vld [vmem:[#allocation5 + $0x210] sm:$0xff]
    %v191 = vld [vmem:[#allocation5 + $0x218] sm:$0xff]
    %v192 = vld [vmem:[#allocation5 + $0x220] sm:$0xff]
    %v193 = vld [vmem:[#allocation5 + $0x228] sm:$0xff]
    %v194 = vld [vmem:[#allocation5 + $0x230] sm:$0xff]
    %v195 = vld [vmem:[#allocation5 + $0x238] sm:$0xff]
    %v196 = vld [vmem:[#allocation5 + $0x240] sm:$0xff]
    %v197 = vld [vmem:[#allocation5 + $0x248] sm:$0xff]
    %v198 = vld [vmem:[#allocation5 + $0x250] sm:$0xff]
    %v199 = vld [vmem:[#allocation5 + $0x258] sm:$0xff]
    %v200 = vld [vmem:[#allocation5 + $0x260] sm:$0xff]
    %v201 = vld [vmem:[#allocation5 + $0x268] sm:$0xff]
    %v202 = vld [vmem:[#allocation5 + $0x270] sm:$0xff]
    %v203 = vld [vmem:[#allocation5 + $0x278] sm:$0xff]
    %v204 = vld [vmem:[#allocation5 + $0x280] sm:$0xff]
    %v205 = vld [vmem:[#allocation5 + $0x288] sm:$0xff]
    %v206 = vld [vmem:[#allocation5 + $0x290] sm:$0xff]
    %v207 = vld [vmem:[#allocation5 + $0x298] sm:$0xff]
    %v208 = vld [vmem:[#allocation5 + $0x2a0] sm:$0xff]
    %v209 = vld [vmem:[#allocation5 + $0x2a8] sm:$0xff]
    %v210 = vld [vmem:[#allocation5 + $0x2b0] sm:$0xff]
    %v211 = vld [vmem:[#allocation5 + $0x2b8] sm:$0xff]
    %v212 = vld [vmem:[#allocation5 + $0x2c0] sm:$0xff]
    %v213 = vld [vmem:[#allocation5 + $0x2c8] sm:$0xff]
    %v214 = vld [vmem:[#allocation5 + $0x2d0] sm:$0xff]
    %v215 = vld [vmem:[#allocation5 + $0x2d8] sm:$0xff]
    %v216 = vld [vmem:[#allocation5 + $0x2e0] sm:$0xff]
    %v217 = vld [vmem:[#allocation5 + $0x2e8] sm:$0xff]
    %v218 = vld [vmem:[#allocation5 + $0x2f0] sm:$0xff]
    %v219 = vld [vmem:[#allocation5 + $0x2f8] sm:$0xff]
    %v220 = vld [vmem:[#allocation5 + $0x300] sm:$0xff]
    %v221 = vld [vmem:[#allocation5 + $0x308] sm:$0xff]
    %v222 = vld [vmem:[#allocation5 + $0x310] sm:$0xff]
    %v223 = vld [vmem:[#allocation5 + $0x318] sm:$0xff]
    %v224 = vld [vmem:[#allocation5 + $0x320] sm:$0xff]
    %v225 = vld [vmem:[#allocation5 + $0x328] sm:$0xff]
    %v226 = vld [vmem:[#allocation5 + $0x330] sm:$0xff]
    %v227 = vld [vmem:[#allocation5 + $0x338] sm:$0xff]
    %v228 = vld [vmem:[#allocation5 + $0x340] sm:$0xff]
    %v229 = vld [vmem:[#allocation5 + $0x348] sm:$0xff]
    %v230 = vld [vmem:[#allocation5 + $0x350] sm:$0xff]
    %v231 = vld [vmem:[#allocation5 + $0x358] sm:$0xff]
    %v232 = vld [vmem:[#allocation5 + $0x360] sm:$0xff]
    %v233 = vld [vmem:[#allocation5 + $0x368] sm:$0xff]
    %v234 = vld [vmem:[#allocation5 + $0x370] sm:$0xff]
    %v235 = vld [vmem:[#allocation5 + $0x378] sm:$0xff]
    %v236 = vld [vmem:[#allocation5 + $0x380] sm:$0xff]
    %v237 = vld [vmem:[#allocation5 + $0x388] sm:$0xff]
    %v238 = vld [vmem:[#allocation5 + $0x390] sm:$0xff]
    %v239 = vld [vmem:[#allocation5 + $0x398] sm:$0xff]
    %v240 = vld [vmem:[#allocation5 + $0x3a0] sm:$0xff]
    %v241 = vld [vmem:[#allocation5 + $0x3a8] sm:$0xff]
    %v242 = vld [vmem:[#allocation5 + $0x3b0] sm:$0xff]
    %v243 = vld [vmem:[#allocation5 + $0x3b8] sm:$0xff]
    %v244 = vld [vmem:[#allocation5 + $0x3c0] sm:$0xff]
    %v245 = vld [vmem:[#allocation5 + $0x3c8] sm:$0xff]
    %v246 = vld [vmem:[#allocation5 + $0x3d0] sm:$0xff]
    %v247 = vld [vmem:[#allocation5 + $0x3d8] sm:$0xff]
    %v248 = vld [vmem:[#allocation5 + $0x3e0] sm:$0xff]
    %v249 = vld [vmem:[#allocation5 + $0x3e8] sm:$0xff]
    %v250 = vld [vmem:[#allocation5 + $0x3f0] sm:$0xff]
    %v251 = vld [vmem:[#allocation5 + $0x3f8] sm:$0xff]
    %v252 = vld [vmem:[#allocation5 + $0x400] sm:$0xff]
    %v253 = vld [vmem:[#allocation5 + $0x408] sm:$0xff]
    %v254 = vld [vmem:[#allocation5 + $0x410] sm:$0xff]
    %v255 = vld [vmem:[#allocation5 + $0x418] sm:$0xff]
    %v256 = vld [vmem:[#allocation5 + $0x420] sm:$0xff]
    %v257 = vld [vmem:[#allocation5 + $0x428] sm:$0xff]
    %v258 = vld [vmem:[#allocation5 + $0x430] sm:$0xff]
    %v259 = vld [vmem:[#allocation5 + $0x438] sm:$0xff]
    %v260 = vld [vmem:[#allocation5 + $0x440] sm:$0xff]
    %v261 = vld [vmem:[#allocation5 + $0x448] sm:$0xff]
    %v262 = vld [vmem:[#allocation5 + $0x450] sm:$0xff]
    %v263 = vld [vmem:[#allocation5 + $0x458] sm:$0xff]
    %v264 = vld [vmem:[#allocation5 + $0x460] sm:$0xff]
    %v265 = vld [vmem:[#allocation5 + $0x468] sm:$0xff]
    %v266 = vld [vmem:[#allocation5 + $0x470] sm:$0xff]
    %v267 = vld [vmem:[#allocation5 + $0x478] sm:$0xff]
    %v268 = vld [vmem:[#allocation5 + $0x480] sm:$0xff]
    %v269 = vld [vmem:[#allocation5 + $0x488] sm:$0xff]
    %v270 = vld [vmem:[#allocation5 + $0x490] sm:$0xff]
    %v271 = vld [vmem:[#allocation5 + $0x498] sm:$0xff]
    %v272 = vld [vmem:[#allocation5 + $0x4a0] sm:$0xff]
    %v273 = vld [vmem:[#allocation5 + $0x4a8] sm:$0xff]
    %v274 = vld [vmem:[#allocation5 + $0x4b0] sm:$0xff]
    %v275 = vld [vmem:[#allocation5 + $0x4b8] sm:$0xff]
    %v276 = vld [vmem:[#allocation5 + $0x4c0] sm:$0xff]
    %v277 = vld [vmem:[#allocation5 + $0x4c8] sm:$0xff]
    %v278 = vld [vmem:[#allocation5 + $0x4d0] sm:$0xff]
    %v279 = vld [vmem:[#allocation5 + $0x4d8] sm:$0xff]
    %v280 = vld [vmem:[#allocation5 + $0x4e0] sm:$0xff]
    %v281 = vld [vmem:[#allocation5 + $0x4e8] sm:$0xff]
    %v282 = vld [vmem:[#allocation5 + $0x4f0] sm:$0xff]
    %v283 = vld [vmem:[#allocation5 + $0x4f8] sm:$0xff]
    %v284 = vld [vmem:[#allocation5 + $0x500] sm:$0xff]
    %v285 = vld [vmem:[#allocation5 + $0x508] sm:$0xff]
    %v286 = vld [vmem:[#allocation5 + $0x510] sm:$0xff]
    %v287 = vld [vmem:[#allocation5 + $0x518] sm:$0xff]
    %v288 = vld [vmem:[#allocation5 + $0x520] sm:$0xff]
    %v289 = vld [vmem:[#allocation5 + $0x528] sm:$0xff]
    %v290 = vld [vmem:[#allocation5 + $0x530] sm:$0xff]
    %v291 = vld [vmem:[#allocation5 + $0x538] sm:$0xff]
    %v292 = vld [vmem:[#allocation5 + $0x540] sm:$0xff]
    %v293 = vld [vmem:[#allocation5 + $0x548] sm:$0xff]
    %v294 = vld [vmem:[#allocation5 + $0x550] sm:$0xff]
    %v295 = vld [vmem:[#allocation5 + $0x558] sm:$0xff]
    %v296 = vld [vmem:[#allocation5 + $0x560] sm:$0xff]
    %v297 = vld [vmem:[#allocation5 + $0x568] sm:$0xff]
    %v298 = vld [vmem:[#allocation5 + $0x570] sm:$0xff]
    %v299 = vld [vmem:[#allocation5 + $0x578] sm:$0xff]
    %v300 = vld [vmem:[#allocation5 + $0x580] sm:$0xff]
    %v301 = vld [vmem:[#allocation5 + $0x588] sm:$0xff]
    %v302 = vld [vmem:[#allocation5 + $0x590] sm:$0xff]
    %v303 = vld [vmem:[#allocation5 + $0x598] sm:$0xff]
    %v304 = vld [vmem:[#allocation5 + $0x5a0] sm:$0xff]
    %v305 = vld [vmem:[#allocation5 + $0x5a8] sm:$0xff]
    %v306 = vld [vmem:[#allocation5 + $0x5b0] sm:$0xff]
    %v307 = vld [vmem:[#allocation5 + $0x5b8] sm:$0xff]
    %v308 = vld [vmem:[#allocation5 + $0x5c0] sm:$0xff]
    %v309 = vld [vmem:[#allocation5 + $0x5c8] sm:$0xff]
    %v310 = vld [vmem:[#allocation5 + $0x5d0] sm:$0xff]
    %v311 = vld [vmem:[#allocation5 + $0x5d8] sm:$0xff]
    %v312 = vld [vmem:[#allocation5 + $0x5e0] sm:$0xff]
    %v313 = vld [vmem:[#allocation5 + $0x5e8] sm:$0xff]
    %v314 = vld [vmem:[#allocation5 + $0x5f0] sm:$0xff]
    %v315 = vld [vmem:[#allocation5 + $0x5f8] sm:$0xff]
    %v316 = vld [vmem:[#allocation5 + $0x600] sm:$0xff]
    %v317 = vld [vmem:[#allocation5 + $0x608] sm:$0xff]
    %v318 = vld [vmem:[#allocation5 + $0x610] sm:$0xff]
    %v319 = vld [vmem:[#allocation5 + $0x618] sm:$0xff]
    %v320 = vld [vmem:[#allocation5 + $0x620] sm:$0xff]
    %v321 = vld [vmem:[#allocation5 + $0x628] sm:$0xff]
    %v322 = vld [vmem:[#allocation5 + $0x630] sm:$0xff]
    %v323 = vld [vmem:[#allocation5 + $0x638] sm:$0xff]
    %v324 = vld [vmem:[#allocation5 + $0x640] sm:$0xff]
    %v325 = vld [vmem:[#allocation5 + $0x648] sm:$0xff]
    %v326 = vld [vmem:[#allocation5 + $0x650] sm:$0xff]
    %v327 = vld [vmem:[#allocation5 + $0x658] sm:$0xff]
    %v328 = vld [vmem:[#allocation5 + $0x660] sm:$0xff]
    %v329 = vld [vmem:[#allocation5 + $0x668] sm:$0xff]
    %v330 = vld [vmem:[#allocation5 + $0x670] sm:$0xff]
    %v331 = vld [vmem:[#allocation5 + $0x678] sm:$0xff]
    %v332 = vld [vmem:[#allocation5 + $0x680] sm:$0xff]
    %v333 = vld [vmem:[#allocation5 + $0x688] sm:$0xff]
    %v334 = vld [vmem:[#allocation5 + $0x690] sm:$0xff]
    %v335 = vld [vmem:[#allocation5 + $0x698] sm:$0xff]
    %v336 = vld [vmem:[#allocation5 + $0x6a0] sm:$0xff]
    %v337 = vld [vmem:[#allocation5 + $0x6a8] sm:$0xff]
    %v338 = vld [vmem:[#allocation5 + $0x6b0] sm:$0xff]
    %v339 = vld [vmem:[#allocation5 + $0x6b8] sm:$0xff]
    %v340 = vld [vmem:[#allocation5 + $0x6c0] sm:$0xff]
    %v341 = vld [vmem:[#allocation5 + $0x6c8] sm:$0xff]
    %v342 = vld [vmem:[#allocation5 + $0x6d0] sm:$0xff]
    %v343 = vld [vmem:[#allocation5 + $0x6d8] sm:$0xff]
    %v344 = vld [vmem:[#allocation5 + $0x6e0] sm:$0xff]
    %v345 = vld [vmem:[#allocation5 + $0x6e8] sm:$0xff]
    %v346 = vld [vmem:[#allocation5 + $0x6f0] sm:$0xff]
    %v347 = vld [vmem:[#allocation5 + $0x6f8] sm:$0xff]
    %v348 = vld [vmem:[#allocation5 + $0x700] sm:$0xff]
    %v349 = vld [vmem:[#allocation5 + $0x708] sm:$0xff]
    %v350 = vld [vmem:[#allocation5 + $0x710] sm:$0xff]
    %v351 = vld [vmem:[#allocation5 + $0x718] sm:$0xff]
    %v352 = vld [vmem:[#allocation5 + $0x720] sm:$0xff]
    %v353 = vld [vmem:[#allocation5 + $0x728] sm:$0xff]
    %v354 = vld [vmem:[#allocation5 + $0x730] sm:$0xff]
    %v355 = vld [vmem:[#allocation5 + $0x738] sm:$0xff]
    %v356 = vld [vmem:[#allocation5 + $0x740] sm:$0xff]
    %v357 = vld [vmem:[#allocation5 + $0x748] sm:$0xff]
    %v358 = vld [vmem:[#allocation5 + $0x750] sm:$0xff]
    %v359 = vld [vmem:[#allocation5 + $0x758] sm:$0xff]
    %v360 = vld [vmem:[#allocation5 + $0x760] sm:$0xff]
    %v361 = vld [vmem:[#allocation5 + $0x768] sm:$0xff]
    %v362 = vld [vmem:[#allocation5 + $0x770] sm:$0xff]
    %v363 = vld [vmem:[#allocation5 + $0x778] sm:$0xff]
    %v364 = vld [vmem:[#allocation5 + $0x780] sm:$0xff]
    %v365 = vld [vmem:[#allocation5 + $0x788] sm:$0xff]
    %v366 = vld [vmem:[#allocation5 + $0x790] sm:$0xff]
    %v367 = vld [vmem:[#allocation5 + $0x798] sm:$0xff]
    %v368 = vld [vmem:[#allocation5 + $0x7a0] sm:$0xff]
    %v369 = vld [vmem:[#allocation5 + $0x7a8] sm:$0xff]
    %v370 = vld [vmem:[#allocation5 + $0x7b0] sm:$0xff]
    %v371 = vld [vmem:[#allocation5 + $0x7b8] sm:$0xff]
    %v372 = vld [vmem:[#allocation5 + $0x7c0] sm:$0xff]
    %v373 = vld [vmem:[#allocation5 + $0x7c8] sm:$0xff]
    %v374 = vld [vmem:[#allocation5 + $0x7d0] sm:$0xff]
    %v375 = vld [vmem:[#allocation5 + $0x7d8] sm:$0xff]
    %v376 = vld [vmem:[#allocation5 + $0x7e0] sm:$0xff]
    %v377 = vld [vmem:[#allocation5 + $0x7e8] sm:$0xff]
    %v378 = vld [vmem:[#allocation5 + $0x7f0] sm:$0xff]
    %v379 = vld [vmem:[#allocation5 + $0x7f8] sm:$0xff]
    %v380 = vld [vmem:[#allocation5 + $0x800] sm:$0xff]
    %v381 = vld [vmem:[#allocation5 + $0x808] sm:$0xff]
    %v382 = vld [vmem:[#allocation5 + $0x810] sm:$0xff]
    %v383 = vld [vmem:[#allocation5 + $0x818] sm:$0xff]
    %v384 = vld [vmem:[#allocation5 + $0x820] sm:$0xff]
    %v385 = vld [vmem:[#allocation5 + $0x828] sm:$0xff]
    %v386 = vld [vmem:[#allocation5 + $0x830] sm:$0xff]
    %v387 = vld [vmem:[#allocation5 + $0x838] sm:$0xff]
    %v388 = vld [vmem:[#allocation5 + $0x840] sm:$0xff]
    %v389 = vld [vmem:[#allocation5 + $0x848] sm:$0xff]
    %v390 = vld [vmem:[#allocation5 + $0x850] sm:$0xff]
    %v391 = vld [vmem:[#allocation5 + $0x858] sm:$0xff]
    %v392 = vld [vmem:[#allocation5 + $0x860] sm:$0xff]
    %v393 = vld [vmem:[#allocation5 + $0x868] sm:$0xff]
    %v394 = vld [vmem:[#allocation5 + $0x870] sm:$0xff]
    %v395 = vld [vmem:[#allocation5 + $0x878] sm:$0xff]
    %v396 = vld [vmem:[#allocation5 + $0x880] sm:$0xff]
    %v397 = vld [vmem:[#allocation5 + $0x888] sm:$0xff]
    %v398 = vld [vmem:[#allocation5 + $0x890] sm:$0xff]
    %v399 = vld [vmem:[#allocation5 + $0x898] sm:$0xff]
    %v400 = vld [vmem:[#allocation5 + $0x8a0] sm:$0xff]
    %v401 = vld [vmem:[#allocation5 + $0x8a8] sm:$0xff]
    %v402 = vld [vmem:[#allocation5 + $0x8b0] sm:$0xff]
    %v403 = vld [vmem:[#allocation5 + $0x8b8] sm:$0xff]
    %v404 = vld [vmem:[#allocation5 + $0x8c0] sm:$0xff]
    %v405 = vld [vmem:[#allocation5 + $0x8c8] sm:$0xff]
    %v406 = vld [vmem:[#allocation5 + $0x8d0] sm:$0xff]
    %v407 = vld [vmem:[#allocation5 + $0x8d8] sm:$0xff]
    %v408 = vld [vmem:[#allocation5 + $0x8e0] sm:$0xff]
    %v409 = vld [vmem:[#allocation5 + $0x8e8] sm:$0xff]
    %v410 = vld [vmem:[#allocation5 + $0x8f0] sm:$0xff]
    %v411 = vld [vmem:[#allocation5 + $0x8f8] sm:$0xff]
    %v412 = vld [vmem:[#allocation5 + $0x900] sm:$0xff]
    %v413 = vld [vmem:[#allocation5 + $0x908] sm:$0xff]
    %v414 = vld [vmem:[#allocation5 + $0x910] sm:$0xff]
    %v415 = vld [vmem:[#allocation5 + $0x918] sm:$0xff]
    %v416 = vld [vmem:[#allocation5 + $0x920] sm:$0xff]
    %v417 = vld [vmem:[#allocation5 + $0x928] sm:$0xff]
    %v418 = vld [vmem:[#allocation5 + $0x930] sm:$0xff]
    %v419 = vld [vmem:[#allocation5 + $0x938] sm:$0xff]
    %v420 = vld [vmem:[#allocation5 + $0x940] sm:$0xff]
    %v421 = vld [vmem:[#allocation5 + $0x948] sm:$0xff]
    %v422 = vld [vmem:[#allocation5 + $0x950] sm:$0xff]
    %v423 = vld [vmem:[#allocation5 + $0x958] sm:$0xff]
    %v424 = vld [vmem:[#allocation5 + $0x960] sm:$0xff]
    %v425 = vld [vmem:[#allocation5 + $0x968] sm:$0xff]
    %v426 = vld [vmem:[#allocation5 + $0x970] sm:$0xff]
    %v427 = vld [vmem:[#allocation5 + $0x978] sm:$0xff]
    %v428 = vld [vmem:[#allocation5 + $0x980] sm:$0xff]
    %v429 = vld [vmem:[#allocation5 + $0x988] sm:$0xff]
    %v430 = vld [vmem:[#allocation5 + $0x990] sm:$0xff]
    %v431 = vld [vmem:[#allocation5 + $0x998] sm:$0xff]
    %v432 = vld [vmem:[#allocation5 + $0x9a0] sm:$0xff]
    %v433 = vld [vmem:[#allocation5 + $0x9a8] sm:$0xff]
    %v434 = vld [vmem:[#allocation5 + $0x9b0] sm:$0xff]
    %v435 = vld [vmem:[#allocation5 + $0x9b8] sm:$0xff]
    %v436 = vld [vmem:[#allocation5 + $0x9c0] sm:$0xff]
    %v437 = vld [vmem:[#allocation5 + $0x9c8] sm:$0xff]
    %v438 = vld [vmem:[#allocation5 + $0x9d0] sm:$0xff]
    %v439 = vld [vmem:[#allocation5 + $0x9d8] sm:$0xff]
    %v440 = vld [vmem:[#allocation5 + $0x9e0] sm:$0xff]
    %v441 = vld [vmem:[#allocation5 + $0x9e8] sm:$0xff]
    %v442 = vld [vmem:[#allocation5 + $0x9f0] sm:$0xff]
    %v443 = vld [vmem:[#allocation5 + $0x9f8] sm:$0xff]
    %v444 = vld [vmem:[#allocation5 + $0xa00] sm:$0xff]
    %v445 = vld [vmem:[#allocation5 + $0xa08] sm:$0xff]
    %v446 = vld [vmem:[#allocation5 + $0xa10] sm:$0xff]
    %v447 = vld [vmem:[#allocation5 + $0xa18] sm:$0xff]
    %v448 = vld [vmem:[#allocation5 + $0xa20] sm:$0xff]
    %v449 = vld [vmem:[#allocation5 + $0xa28] sm:$0xff]
    %v450 = vld [vmem:[#allocation5 + $0xa30] sm:$0xff]
    %v451 = vld [vmem:[#allocation5 + $0xa38] sm:$0xff]
    %v452 = vld [vmem:[#allocation5 + $0xa40] sm:$0xff]
    %v453 = vld [vmem:[#allocation5 + $0xa48] sm:$0xff]
    %v454 = vld [vmem:[#allocation5 + $0xa50] sm:$0xff]
    %v455 = vld [vmem:[#allocation5 + $0xa58] sm:$0xff]
    %v456 = vld [vmem:[#allocation5 + $0xa60] sm:$0xff]
    %v457 = vld [vmem:[#allocation5 + $0xa68] sm:$0xff]
    %v458 = vld [vmem:[#allocation5 + $0xa70] sm:$0xff]
    %v459 = vld [vmem:[#allocation5 + $0xa78] sm:$0xff]
    %v460 = vld [vmem:[#allocation5 + $0xa80] sm:$0xff]
    %v461 = vld [vmem:[#allocation5 + $0xa88] sm:$0xff]
    %v462 = vld [vmem:[#allocation5 + $0xa90] sm:$0xff]
    %v463 = vld [vmem:[#allocation5 + $0xa98] sm:$0xff]
    %v464 = vld [vmem:[#allocation5 + $0xaa0] sm:$0xff]
    %v465 = vld [vmem:[#allocation5 + $0xaa8] sm:$0xff]
    %v466 = vld [vmem:[#allocation5 + $0xab0] sm:$0xff]
    %v467 = vld [vmem:[#allocation5 + $0xab8] sm:$0xff]
    %v468 = vld [vmem:[#allocation5 + $0xac0] sm:$0xff]
    %v469 = vld [vmem:[#allocation5 + $0xac8] sm:$0xff]
    %v470 = vld [vmem:[#allocation5 + $0xad0] sm:$0xff]
    %v471 = vld [vmem:[#allocation5 + $0xad8] sm:$0xff]
    %v472 = vld [vmem:[#allocation5 + $0xae0] sm:$0xff]
    %v473 = vld [vmem:[#allocation5 + $0xae8] sm:$0xff]
    %v474 = vld [vmem:[#allocation5 + $0xaf0] sm:$0xff]
    %v475 = vld [vmem:[#allocation5 + $0xaf8] sm:$0xff]
    %v476 = vld [vmem:[#allocation5 + $0xb00] sm:$0xff]
    %v477 = vld [vmem:[#allocation5 + $0xb08] sm:$0xff]
    %v478 = vld [vmem:[#allocation5 + $0xb10] sm:$0xff]
    %v479 = vld [vmem:[#allocation5 + $0xb18] sm:$0xff]
    %v480 = vld [vmem:[#allocation5 + $0xb20] sm:$0xff]
    %v481 = vld [vmem:[#allocation5 + $0xb28] sm:$0xff]
    %v482 = vld [vmem:[#allocation5 + $0xb30] sm:$0xff]
    %v483 = vld [vmem:[#allocation5 + $0xb38] sm:$0xff]
    %v484 = vld [vmem:[#allocation5 + $0xb40] sm:$0xff]
    %v485 = vld [vmem:[#allocation5 + $0xb48] sm:$0xff]
    %v486 = vld [vmem:[#allocation5 + $0xb50] sm:$0xff]
    %v487 = vld [vmem:[#allocation5 + $0xb58] sm:$0xff]
    %v488 = vld [vmem:[#allocation5 + $0xb60] sm:$0xff]
    %v489 = vld [vmem:[#allocation5 + $0xb68] sm:$0xff]
    %v490 = vld [vmem:[#allocation5 + $0xb70] sm:$0xff]
    %v491 = vld [vmem:[#allocation5 + $0xb78] sm:$0xff]
    %v492 = vld [vmem:[#allocation5 + $0xb80] sm:$0xff]
    %v493 = vld [vmem:[#allocation5 + $0xb88] sm:$0xff]
    %v494 = vld [vmem:[#allocation5 + $0xb90] sm:$0xff]
    %v495 = vld [vmem:[#allocation5 + $0xb98] sm:$0xff]
    %v496 = vld [vmem:[#allocation5 + $0xba0] sm:$0xff]
    %v497 = vld [vmem:[#allocation5 + $0xba8] sm:$0xff]
    %v498 = vld [vmem:[#allocation5 + $0xbb0] sm:$0xff]
    %v499 = vld [vmem:[#allocation5 + $0xbb8] sm:$0xff]
    %v500 = vld [vmem:[#allocation5 + $0xbc0] sm:$0xff]
    %v501 = vld [vmem:[#allocation5 + $0xbc8] sm:$0xff]
    %v502 = vld [vmem:[#allocation5 + $0xbd0] sm:$0xff]
    %v503 = vld [vmem:[#allocation5 + $0xbd8] sm:$0xff]
    %v504 = vld [vmem:[#allocation5 + $0xbe0] sm:$0xff]
    %v505 = vld [vmem:[#allocation5 + $0xbe8] sm:$0xff]
    %v506 = vld [vmem:[#allocation5 + $0xbf0] sm:$0xff]
    %v507 = vld [vmem:[#allocation5 + $0xbf8] sm:$0xff]
    %v508 = vld [vmem:[#allocation5 + $0xc00] sm:$0xff]
    %v509 = vld [vmem:[#allocation5 + $0xc08] sm:$0xff]
    %v510 = vld [vmem:[#allocation5 + $0xc10] sm:$0xff]
    %v511 = vld [vmem:[#allocation5 + $0xc18] sm:$0xff]
    %v512 = vld [vmem:[#allocation5 + $0xc20] sm:$0xff]
    %v513 = vld [vmem:[#allocation5 + $0xc28] sm:$0xff]
    %v514 = vld [vmem:[#allocation5 + $0xc30] sm:$0xff]
    %v515 = vld [vmem:[#allocation5 + $0xc38] sm:$0xff]
    %v516 = vld [vmem:[#allocation7] sm:$0xf]
    %v518 = vlaneseq
    %v519 = vshrl.u32 %v518, 7
    %v520 = vsub.s32 0, %v519
    %v521 = vrot.slane %v516, %v520
    %v522 = vlaneseq
    %v523 = vshrl.u32 %v522, 7
    %v524 = vsub.s32 1, %v523
    %v525 = vrot.slane %v516, %v524
    %v526 = vlaneseq
    %v527 = vshrl.u32 %v526, 7
    %v528 = vsub.s32 2, %v527
    %v529 = vrot.slane %v516, %v528
    %v530 = vlaneseq
    %v531 = vshrl.u32 %v530, 7
    %v532 = vsub.s32 3, %v531
    %v533 = vrot.slane %v516, %v532
    %v546 = vcombine.low %v116, %v120
    %v547 = vcombine.high %v116, %v120
    %v548 = vcombine.low %v117, %v121
    %v549 = vcombine.high %v117, %v121
    %v550 = vcombine.low %v118, %v122
    %v551 = vcombine.high %v118, %v122
    %v552 = vcombine.low %v119, %v123
    %vm559 = vcmask 130048
    %v560 = vsel %vm559, %v552, 0
    %562 = vmatprep.subr.mxu0 %v125
    %563 = vmatpush1.msra.mxu0 %v124
    %564 = vmatprep.subr.mxu0 %v129
    %565 = vmatpush1.msra.mxu0 %v128
    %566 = vmatprep.subr.mxu0 %v133
    %567 = vmatpush1.msra.mxu0 %v132
    %568 = vmatprep.subr.mxu0 %v137
    %569 = vmatpush1.msra.mxu0 %v136
    %570 = vmatprep.subr.mxu0 %v141
    %571 = vmatpush1.msra.mxu0 %v140
    %572 = vmatprep.subr.mxu0 %v145
    %573 = vmatpush1.msra.mxu0 %v144
    %574 = vmatprep.subr.mxu0 %v149
    %575 = vmatpush1.msra.mxu0 %v148
    %576 = vmatprep.subr.mxu0 %v153
    %577 = vmatpush1.msra.mxu0 %v152
    %578 = vmatprep.subr.mxu0 %v157
    %579 = vmatpush1.msra.mxu0 %v156
    %580 = vmatprep.subr.mxu0 %v161
    %581 = vmatpush1.msra.mxu0 %v160
    %582 = vmatprep.subr.mxu0 %v165
    %583 = vmatpush1.msra.mxu0 %v164
    %584 = vmatprep.subr.mxu0 %v169
    %585 = vmatpush1.msra.mxu0 %v168
    %586 = vmatprep.subr.mxu0 %v173
    %587 = vmatpush1.msra.mxu0 %v172
    %588 = vmatprep.subr.mxu0 %v177
    %589 = vmatpush1.msra.mxu0 %v176
    %590 = vmatprep.subr.mxu0 %v181
    %591 = vmatpush1.msra.mxu0 %v180
    %592 = vmatprep.subr.mxu0 %v185
    %593 = vmatpush1.msra.mxu0 %v184
    %594 = vmatprep.subr.mxu0 %v189
    %595 = vmatpush1.msra.mxu0 %v188
    %596 = vmatprep.subr.mxu0 %v193
    %597 = vmatpush1.msra.mxu0 %v192
    %598 = vmatprep.subr.mxu0 %v197
    %599 = vmatpush1.msra.mxu0 %v196
    %600 = vmatprep.subr.mxu0 %v201
    %601 = vmatpush1.msra.mxu0 %v200
    %602 = vmatprep.subr.mxu0 %v205
    %603 = vmatpush1.msra.mxu0 %v204
    %604 = vmatprep.subr.mxu0 %v209
    %605 = vmatpush1.msra.mxu0 %v208
    %606 = vmatprep.subr.mxu0 %v213
    %607 = vmatpush1.msra.mxu0 %v212
    %608 = vmatprep.subr.mxu0 %v217
    %609 = vmatpush1.msra.mxu0 %v216
    %610 = vmatprep.subr.mxu0 %v221
    %611 = vmatpush1.msra.mxu0 %v220
    %612 = vmatprep.subr.mxu0 %v225
    %613 = vmatpush1.msra.mxu0 %v224
    %614 = vmatprep.subr.mxu0 %v229
    %615 = vmatpush1.msra.mxu0 %v228
    %616 = vmatprep.subr.mxu0 %v233
    %617 = vmatpush1.msra.mxu0 %v232
    %618 = vmatprep.subr.mxu0 %v237
    %619 = vmatpush1.msra.mxu0 %v236
    %620 = vmatprep.subr.mxu0 %v241
    %621 = vmatpush1.msra.mxu0 %v240
    %622 = vmatprep.subr.mxu0 %v245
    %623 = vmatpush1.msra.mxu0 %v244
    %624 = vmatprep.subr.mxu0 %v249
    %625 = vmatpush1.msra.mxu0 %v248
    %626 = vmatprep.mubr.f32.mxu0 %v547
    %627 = vmatmul.mubr.f32.gmra.mrb[0].mxu0 %v546
    %v628 = vpop.f32.mrb[0].mxu0
    %v629 = vadd.f32 %v521, %v628
    %v630 = vpop.f32.mrb[0].mxu0
    %v631 = vadd.f32 %v525, %v630
    %632 = vdwg.mxu0
    %633 = vmatprep.subr.mxu0 %v253
    %634 = vmatpush1.msra.mxu0 %v252
    %635 = vmatprep.subr.mxu0 %v257
    %636 = vmatpush1.msra.mxu0 %v256
    %637 = vmatprep.subr.mxu0 %v261
    %638 = vmatpush1.msra.mxu0 %v260
    %639 = vmatprep.subr.mxu0 %v265
    %640 = vmatpush1.msra.mxu0 %v264
    %641 = vmatprep.subr.mxu0 %v269
    %642 = vmatpush1.msra.mxu0 %v268
    %643 = vmatprep.subr.mxu0 %v273
    %644 = vmatpush1.msra.mxu0 %v272
    %645 = vmatprep.subr.mxu0 %v277
    %646 = vmatpush1.msra.mxu0 %v276
    %647 = vmatprep.subr.mxu0 %v281
    %648 = vmatpush1.msra.mxu0 %v280
    %649 = vmatprep.subr.mxu0 %v285
    %650 = vmatpush1.msra.mxu0 %v284
    %651 = vmatprep.subr.mxu0 %v289
    %652 = vmatpush1.msra.mxu0 %v288
    %653 = vmatprep.subr.mxu0 %v293
    %654 = vmatpush1.msra.mxu0 %v292
    %655 = vmatprep.subr.mxu0 %v297
    %656 = vmatpush1.msra.mxu0 %v296
    %657 = vmatprep.subr.mxu0 %v301
    %658 = vmatpush1.msra.mxu0 %v300
    %659 = vmatprep.subr.mxu0 %v305
    %660 = vmatpush1.msra.mxu0 %v304
    %661 = vmatprep.subr.mxu0 %v309
    %662 = vmatpush1.msra.mxu0 %v308
    %663 = vmatprep.subr.mxu0 %v313
    %664 = vmatpush1.msra.mxu0 %v312
    %665 = vmatprep.subr.mxu0 %v317
    %666 = vmatpush1.msra.mxu0 %v316
    %667 = vmatprep.subr.mxu0 %v321
    %668 = vmatpush1.msra.mxu0 %v320
    %669 = vmatprep.subr.mxu0 %v325
    %670 = vmatpush1.msra.mxu0 %v324
    %671 = vmatprep.subr.mxu0 %v329
    %672 = vmatpush1.msra.mxu0 %v328
    %673 = vmatprep.subr.mxu0 %v333
    %674 = vmatpush1.msra.mxu0 %v332
    %675 = vmatprep.subr.mxu0 %v337
    %676 = vmatpush1.msra.mxu0 %v336
    %677 = vmatprep.subr.mxu0 %v341
    %678 = vmatpush1.msra.mxu0 %v340
    %679 = vmatprep.subr.mxu0 %v345
    %680 = vmatpush1.msra.mxu0 %v344
    %681 = vmatprep.subr.mxu0 %v349
    %682 = vmatpush1.msra.mxu0 %v348
    %683 = vmatprep.subr.mxu0 %v353
    %684 = vmatpush1.msra.mxu0 %v352
    %685 = vmatprep.subr.mxu0 %v357
    %686 = vmatpush1.msra.mxu0 %v356
    %687 = vmatprep.subr.mxu0 %v361
    %688 = vmatpush1.msra.mxu0 %v360
    %689 = vmatprep.subr.mxu0 %v365
    %690 = vmatpush1.msra.mxu0 %v364
    %691 = vmatprep.subr.mxu0 %v369
    %692 = vmatpush1.msra.mxu0 %v368
    %693 = vmatprep.subr.mxu0 %v373
    %694 = vmatpush1.msra.mxu0 %v372
    %695 = vmatprep.subr.mxu0 %v377
    %696 = vmatpush1.msra.mxu0 %v376
    %697 = vmatprep.mubr.f32.mxu0 %v549
    %698 = vmatmul.mubr.f32.gmra.mrb[0].mxu0 %v548
    %v699 = vpop.f32.mrb[0].mxu0
    %v700 = vadd.f32 %v629, %v699
    %v701 = vpop.f32.mrb[0].mxu0
    %v702 = vadd.f32 %v631, %v701
    %703 = vdwg.mxu0
    %704 = vmatprep.subr.mxu0 %v381
    %705 = vmatpush1.msra.mxu0 %v380
    %706 = vmatprep.subr.mxu0 %v385
    %707 = vmatpush1.msra.mxu0 %v384
    %708 = vmatprep.subr.mxu0 %v389
    %709 = vmatpush1.msra.mxu0 %v388
    %710 = vmatprep.subr.mxu0 %v393
    %711 = vmatpush1.msra.mxu0 %v392
    %712 = vmatprep.subr.mxu0 %v397
    %713 = vmatpush1.msra.mxu0 %v396
    %714 = vmatprep.subr.mxu0 %v401
    %715 = vmatpush1.msra.mxu0 %v400
    %716 = vmatprep.subr.mxu0 %v405
    %717 = vmatpush1.msra.mxu0 %v404
    %718 = vmatprep.subr.mxu0 %v409
    %719 = vmatpush1.msra.mxu0 %v408
    %720 = vmatprep.subr.mxu0 %v413
    %721 = vmatpush1.msra.mxu0 %v412
    %722 = vmatprep.subr.mxu0 %v417
    %723 = vmatpush1.msra.mxu0 %v416
    %724 = vmatprep.subr.mxu0 %v421
    %725 = vmatpush1.msra.mxu0 %v420
    %726 = vmatprep.subr.mxu0 %v425
    %727 = vmatpush1.msra.mxu0 %v424
    %728 = vmatprep.subr.mxu0 %v429
    %729 = vmatpush1.msra.mxu0 %v428
    %730 = vmatprep.subr.mxu0 %v433
    %731 = vmatpush1.msra.mxu0 %v432
    %732 = vmatprep.subr.mxu0 %v437
    %733 = vmatpush1.msra.mxu0 %v436
    %734 = vmatprep.subr.mxu0 %v441
    %735 = vmatpush1.msra.mxu0 %v440
    %736 = vmatprep.subr.mxu0 %v445
    %737 = vmatpush1.msra.mxu0 %v444
    %738 = vmatprep.subr.mxu0 %v449
    %739 = vmatpush1.msra.mxu0 %v448
    %740 = vmatprep.subr.mxu0 %v453
    %741 = vmatpush1.msra.mxu0 %v452
    %742 = vmatprep.subr.mxu0 %v457
    %743 = vmatpush1.msra.mxu0 %v456
    %744 = vmatprep.subr.mxu0 %v461
    %745 = vmatpush1.msra.mxu0 %v460
    %746 = vmatprep.subr.mxu0 %v465
    %747 = vmatpush1.msra.mxu0 %v464
    %748 = vmatprep.subr.mxu0 %v469
    %749 = vmatpush1.msra.mxu0 %v468
    %750 = vmatprep.subr.mxu0 %v473
    %751 = vmatpush1.msra.mxu0 %v472
    %752 = vmatprep.subr.mxu0 %v477
    %753 = vmatpush1.msra.mxu0 %v476
    %754 = vmatprep.subr.mxu0 %v481
    %755 = vmatpush1.msra.mxu0 %v480
    %756 = vmatprep.subr.mxu0 %v485
    %757 = vmatpush1.msra.mxu0 %v484
    %758 = vmatprep.subr.mxu0 %v489
    %759 = vmatpush1.msra.mxu0 %v488
    %760 = vmatprep.subr.mxu0 %v493
    %761 = vmatpush1.msra.mxu0 %v492
    %762 = vmatprep.subr.mxu0 %v497
    %763 = vmatpush1.msra.mxu0 %v496
    %764 = vmatprep.subr.mxu0 %v501
    %765 = vmatpush1.msra.mxu0 %v500
    %766 = vmatprep.subr.mxu0 %v505
    %767 = vmatpush1.msra.mxu0 %v504
    %768 = vmatprep.mubr.f32.mxu0 %v551
    %769 = vmatmul.mubr.f32.gmra.mrb[0].mxu0 %v550
    %v770 = vpop.f32.mrb[0].mxu0
    %v771 = vadd.f32 %v700, %v770
    %v772 = vpop.f32.mrb[0].mxu0
    %v773 = vadd.f32 %v702, %v772
    %774 = vdwg.mxu0
    %775 = vmatprep.subr.mxu0 %v509
    %776 = vmatpush1.msra.mxu0 %v508
    %777 = vmatprep.subr.mxu0 %v513
    %778 = vmatpush1.msra.mxu0 %v512
    %779 = vmatprep.subr.mxu0 0.0
    %780 = vmatpush1.msra.mxu0 0.0
    %781 = vmatprep.subr.mxu0 0.0
    %782 = vmatpush1.msra.mxu0 0.0
    %783 = vmatprep.subr.mxu0 0.0
    %784 = vmatpush1.msra.mxu0 0.0
    %785 = vmatprep.subr.mxu0 0.0
    %786 = vmatpush1.msra.mxu0 0.0
    %787 = vmatprep.subr.mxu0 0.0
    %788 = vmatpush1.msra.mxu0 0.0
    %789 = vmatprep.subr.mxu0 0.0
    %790 = vmatpush1.msra.mxu0 0.0
    %791 = vmatprep.subr.mxu0 0.0
    %792 = vmatpush1.msra.mxu0 0.0
    %793 = vmatprep.subr.mxu0 0.0
    %794 = vmatpush1.msra.mxu0 0.0
    %795 = vmatprep.subr.mxu0 0.0
    %796 = vmatpush1.msra.mxu0 0.0
    %797 = vmatprep.subr.mxu0 0.0
    %798 = vmatpush1.msra.mxu0 0.0
    %799 = vmatprep.subr.mxu0 0.0
    %800 = vmatpush1.msra.mxu0 0.0
    %801 = vmatprep.subr.mxu0 0.0
    %802 = vmatpush1.msra.mxu0 0.0
    %803 = vmatprep.subr.mxu0 0.0
    %804 = vmatpush1.msra.mxu0 0.0
    %805 = vmatprep.subr.mxu0 0.0
    %806 = vmatpush1.msra.mxu0 0.0
    %807 = vmatprep.subr.mxu0 0.0
    %808 = vmatpush1.msra.mxu0 0.0
    %809 = vmatprep.subr.mxu0 0.0
    %810 = vmatpush1.msra.mxu0 0.0
    %811 = vmatprep.subr.mxu0 0.0
    %812 = vmatpush1.msra.mxu0 0.0
    %813 = vmatprep.subr.mxu0 0.0
    %814 = vmatpush1.msra.mxu0 0.0
    %815 = vmatprep.subr.mxu0 0.0
    %816 = vmatpush1.msra.mxu0 0.0
    %817 = vmatprep.subr.mxu0 0.0
    %818 = vmatpush1.msra.mxu0 0.0
    %819 = vmatprep.subr.mxu0 0.0
    %820 = vmatpush1.msra.mxu0 0.0
    %821 = vmatprep.subr.mxu0 0.0
    %822 = vmatpush1.msra.mxu0 0.0
    %823 = vmatprep.subr.mxu0 0.0
    %824 = vmatpush1.msra.mxu0 0.0
    %825 = vmatprep.subr.mxu0 0.0
    %826 = vmatpush1.msra.mxu0 0.0
    %827 = vmatprep.subr.mxu0 0.0
    %828 = vmatpush1.msra.mxu0 0.0
    %829 = vmatprep.subr.mxu0 0.0
    %830 = vmatpush1.msra.mxu0 0.0
    %831 = vmatprep.subr.mxu0 0.0
    %832 = vmatpush1.msra.mxu0 0.0
    %833 = vmatprep.subr.mxu0 0.0
    %834 = vmatpush1.msra.mxu0 0.0
    %835 = vmatprep.subr.mxu0 0.0
    %836 = vmatpush1.msra.mxu0 0.0
    %837 = vmatprep.subr.mxu0 0.0
    %838 = vmatpush1.msra.mxu0 0.0
    %839 = vmatprep.mubr.f32.mxu0 0.0
    %840 = vmatmul.mubr.f32.gmra.mrb[0].mxu0 %v560
    %v841 = vpop.f32.mrb[0].mxu0
    %v842 = vadd.f32 %v771, %v841
    %v843 = vpop.f32.mrb[0].mxu0
    %v844 = vadd.f32 %v773, %v843
    %845 = vdwg.mxu0
    %846 = vmatprep.subr.mxu0 %v127
    %847 = vmatpush1.msra.mxu0 %v126
    %848 = vmatprep.subr.mxu0 %v131
    %849 = vmatpush1.msra.mxu0 %v130
    %850 = vmatprep.subr.mxu0 %v135
    %851 = vmatpush1.msra.mxu0 %v134
    %852 = vmatprep.subr.mxu0 %v139
    %853 = vmatpush1.msra.mxu0 %v138
    %854 = vmatprep.subr.mxu0 %v143
    %855 = vmatpush1.msra.mxu0 %v142
    %856 = vmatprep.subr.mxu0 %v147
    %857 = vmatpush1.msra.mxu0 %v146
    %858 = vmatprep.subr.mxu0 %v151
    %859 = vmatpush1.msra.mxu0 %v150
    %860 = vmatprep.subr.mxu0 %v155
    %861 = vmatpush1.msra.mxu0 %v154
    %862 = vmatprep.subr.mxu0 %v159
    %863 = vmatpush1.msra.mxu0 %v158
    %864 = vmatprep.subr.mxu0 %v163
    %865 = vmatpush1.msra.mxu0 %v162
    %866 = vmatprep.subr.mxu0 %v167
    %867 = vmatpush1.msra.mxu0 %v166
    %868 = vmatprep.subr.mxu0 %v171
    %869 = vmatpush1.msra.mxu0 %v170
    %870 = vmatprep.subr.mxu0 %v175
    %871 = vmatpush1.msra.mxu0 %v174
    %872 = vmatprep.subr.mxu0 %v179
    %873 = vmatpush1.msra.mxu0 %v178
    %874 = vmatprep.subr.mxu0 %v183
    %875 = vmatpush1.msra.mxu0 %v182
    %876 = vmatprep.subr.mxu0 %v187
    %877 = vmatpush1.msra.mxu0 %v186
    %878 = vmatprep.subr.mxu0 %v191
    %879 = vmatpush1.msra.mxu0 %v190
    %880 = vmatprep.subr.mxu0 %v195
    %881 = vmatpush1.msra.mxu0 %v194
    %882 = vmatprep.subr.mxu0 %v199
    %883 = vmatpush1.msra.mxu0 %v198
    %884 = vmatprep.subr.mxu0 %v203
    %885 = vmatpush1.msra.mxu0 %v202
    %886 = vmatprep.subr.mxu0 %v207
    %887 = vmatpush1.msra.mxu0 %v206
    %888 = vmatprep.subr.mxu0 %v211
    %889 = vmatpush1.msra.mxu0 %v210
    %890 = vmatprep.subr.mxu0 %v215
    %891 = vmatpush1.msra.mxu0 %v214
    %892 = vmatprep.subr.mxu0 %v219
    %893 = vmatpush1.msra.mxu0 %v218
    %894 = vmatprep.subr.mxu0 %v223
    %895 = vmatpush1.msra.mxu0 %v222
    %896 = vmatprep.subr.mxu0 %v227
    %897 = vmatpush1.msra.mxu0 %v226
    %898 = vmatprep.subr.mxu0 %v231
    %899 = vmatpush1.msra.mxu0 %v230
    %900 = vmatprep.subr.mxu0 %v235
    %901 = vmatpush1.msra.mxu0 %v234
    %902 = vmatprep.subr.mxu0 %v239
    %903 = vmatpush1.msra.mxu0 %v238
    %904 = vmatprep.subr.mxu0 %v243
    %905 = vmatpush1.msra.mxu0 %v242
    %906 = vmatprep.subr.mxu0 %v247
    %907 = vmatpush1.msra.mxu0 %v246
    %908 = vmatprep.subr.mxu0 %v251
    %909 = vmatpush1.msra.mxu0 %v250
    %910 = vmatprep.mubr.f32.mxu0 %v547
    %911 = vmatmul.mubr.f32.gmra.mrb[0].mxu0 %v546
    %v912 = vpop.f32.mrb[0].mxu0
    %v913 = vadd.f32 %v529, %v912
    %v914 = vpop.f32.mrb[0].mxu0
    %v915 = vadd.f32 %v533, %v914
    %916 = vdwg.mxu0
    %917 = vmatprep.subr.mxu0 %v255
    %918 = vmatpush1.msra.mxu0 %v254
    %919 = vmatprep.subr.mxu0 %v259
    %920 = vmatpush1.msra.mxu0 %v258
    %921 = vmatprep.subr.mxu0 %v263
    %922 = vmatpush1.msra.mxu0 %v262
    %923 = vmatprep.subr.mxu0 %v267
    %924 = vmatpush1.msra.mxu0 %v266
    %925 = vmatprep.subr.mxu0 %v271
    %926 = vmatpush1.msra.mxu0 %v270
    %927 = vmatprep.subr.mxu0 %v275
    %928 = vmatpush1.msra.mxu0 %v274
    %929 = vmatprep.subr.mxu0 %v279
    %930 = vmatpush1.msra.mxu0 %v278
    %931 = vmatprep.subr.mxu0 %v283
    %932 = vmatpush1.msra.mxu0 %v282
    %933 = vmatprep.subr.mxu0 %v287
    %934 = vmatpush1.msra.mxu0 %v286
    %935 = vmatprep.subr.mxu0 %v291
    %936 = vmatpush1.msra.mxu0 %v290
    %937 = vmatprep.subr.mxu0 %v295
    %938 = vmatpush1.msra.mxu0 %v294
    %939 = vmatprep.subr.mxu0 %v299
    %940 = vmatpush1.msra.mxu0 %v298
    %941 = vmatprep.subr.mxu0 %v303
    %942 = vmatpush1.msra.mxu0 %v302
    %943 = vmatprep.subr.mxu0 %v307
    %944 = vmatpush1.msra.mxu0 %v306
    %945 = vmatprep.subr.mxu0 %v311
    %946 = vmatpush1.msra.mxu0 %v310
    %947 = vmatprep.subr.mxu0 %v315
    %948 = vmatpush1.msra.mxu0 %v314
    %949 = vmatprep.subr.mxu0 %v319
    %950 = vmatpush1.msra.mxu0 %v318
    %951 = vmatprep.subr.mxu0 %v323
    %952 = vmatpush1.msra.mxu0 %v322
    %953 = vmatprep.subr.mxu0 %v327
    %954 = vmatpush1.msra.mxu0 %v326
    %955 = vmatprep.subr.mxu0 %v331
    %956 = vmatpush1.msra.mxu0 %v330
    %957 = vmatprep.subr.mxu0 %v335
    %958 = vmatpush1.msra.mxu0 %v334
    %959 = vmatprep.subr.mxu0 %v339
    %960 = vmatpush1.msra.mxu0 %v338
    %961 = vmatprep.subr.mxu0 %v343
    %962 = vmatpush1.msra.mxu0 %v342
    %963 = vmatprep.subr.mxu0 %v347
    %964 = vmatpush1.msra.mxu0 %v346
    %965 = vmatprep.subr.mxu0 %v351
    %966 = vmatpush1.msra.mxu0 %v350
    %967 = vmatprep.subr.mxu0 %v355
    %968 = vmatpush1.msra.mxu0 %v354
    %969 = vmatprep.subr.mxu0 %v359
    %970 = vmatpush1.msra.mxu0 %v358
    %971 = vmatprep.subr.mxu0 %v363
    %972 = vmatpush1.msra.mxu0 %v362
    %973 = vmatprep.subr.mxu0 %v367
    %974 = vmatpush1.msra.mxu0 %v366
    %975 = vmatprep.subr.mxu0 %v371
    %976 = vmatpush1.msra.mxu0 %v370
    %977 = vmatprep.subr.mxu0 %v375
    %978 = vmatpush1.msra.mxu0 %v374
    %979 = vmatprep.subr.mxu0 %v379
    %980 = vmatpush1.msra.mxu0 %v378
    %981 = vmatprep.mubr.f32.mxu0 %v549
    %982 = vmatmul.mubr.f32.gmra.mrb[0].mxu0 %v548
    %v983 = vpop.f32.mrb[0].mxu0
    %v984 = vadd.f32 %v913, %v983
    %v985 = vpop.f32.mrb[0].mxu0
    %v986 = vadd.f32 %v915, %v985
    %987 = vdwg.mxu0
    %988 = vmatprep.subr.mxu0 %v383
    %989 = vmatpush1.msra.mxu0 %v382
    %990 = vmatprep.subr.mxu0 %v387
    %991 = vmatpush1.msra.mxu0 %v386
    %992 = vmatprep.subr.mxu0 %v391
    %993 = vmatpush1.msra.mxu0 %v390
    %994 = vmatprep.subr.mxu0 %v395
    %995 = vmatpush1.msra.mxu0 %v394
    %996 = vmatprep.subr.mxu0 %v399
    %997 = vmatpush1.msra.mxu0 %v398
    %998 = vmatprep.subr.mxu0 %v403
    %999 = vmatpush1.msra.mxu0 %v402
    %1000 = vmatprep.subr.mxu0 %v407
    %1001 = vmatpush1.msra.mxu0 %v406
    %1002 = vmatprep.subr.mxu0 %v411
    %1003 = vmatpush1.msra.mxu0 %v410
    %1004 = vmatprep.subr.mxu0 %v415
    %1005 = vmatpush1.msra.mxu0 %v414
    %1006 = vmatprep.subr.mxu0 %v419
    %1007 = vmatpush1.msra.mxu0 %v418
    %1008 = vmatprep.subr.mxu0 %v423
    %1009 = vmatpush1.msra.mxu0 %v422
    %1010 = vmatprep.subr.mxu0 %v427
    %1011 = vmatpush1.msra.mxu0 %v426
    %1012 = vmatprep.subr.mxu0 %v431
    %1013 = vmatpush1.msra.mxu0 %v430
    %1014 = vmatprep.subr.mxu0 %v435
    %1015 = vmatpush1.msra.mxu0 %v434
    %1016 = vmatprep.subr.mxu0 %v439
    %1017 = vmatpush1.msra.mxu0 %v438
    %1018 = vmatprep.subr.mxu0 %v443
    %1019 = vmatpush1.msra.mxu0 %v442
    %1020 = vmatprep.subr.mxu0 %v447
    %1021 = vmatpush1.msra.mxu0 %v446
    %1022 = vmatprep.subr.mxu0 %v451
    %1023 = vmatpush1.msra.mxu0 %v450
    %1024 = vmatprep.subr.mxu0 %v455
    %1025 = vmatpush1.msra.mxu0 %v454
    %1026 = vmatprep.subr.mxu0 %v459
    %1027 = vmatpush1.msra.mxu0 %v458
    %1028 = vmatprep.subr.mxu0 %v463
    %1029 = vmatpush1.msra.mxu0 %v462
    %1030 = vmatprep.subr.mxu0 %v467
    %1031 = vmatpush1.msra.mxu0 %v466
    %1032 = vmatprep.subr.mxu0 %v471
    %1033 = vmatpush1.msra.mxu0 %v470
    %1034 = vmatprep.subr.mxu0 %v475
    %1035 = vmatpush1.msra.mxu0 %v474
    %1036 = vmatprep.subr.mxu0 %v479
    %1037 = vmatpush1.msra.mxu0 %v478
    %1038 = vmatprep.subr.mxu0 %v483
    %1039 = vmatpush1.msra.mxu0 %v482
    %1040 = vmatprep.subr.mxu0 %v487
    %1041 = vmatpush1.msra.mxu0 %v486
    %1042 = vmatprep.subr.mxu0 %v491
    %1043 = vmatpush1.msra.mxu0 %v490
    %1044 = vmatprep.subr.mxu0 %v495
    %1045 = vmatpush1.msra.mxu0 %v494
    %1046 = vmatprep.subr.mxu0 %v499
    %1047 = vmatpush1.msra.mxu0 %v498
    %1048 = vmatprep.subr.mxu0 %v503
    %1049 = vmatpush1.msra.mxu0 %v502
    %1050 = vmatprep.subr.mxu0 %v507
    %1051 = vmatpush1.msra.mxu0 %v506
    %1052 = vmatprep.mubr.f32.mxu0 %v551
    %1053 = vmatmul.mubr.f32.gmra.mrb[0].mxu0 %v550
    %v1054 = vpop.f32.mrb[0].mxu0
    %v1055 = vadd.f32 %v984, %v1054
    %v1056 = vpop.f32.mrb[0].mxu0
    %v1057 = vadd.f32 %v986, %v1056
    %1058 = vdwg.mxu0
    %1059 = vmatprep.subr.mxu0 %v511
    %1060 = vmatpush1.msra.mxu0 %v510
    %1061 = vmatprep.subr.mxu0 %v515
    %1062 = vmatpush1.msra.mxu0 %v514
    %1063 = vmatprep.subr.mxu0 0.0
    %1064 = vmatpush1.msra.mxu0 0.0
    %1065 = vmatprep.subr.mxu0 0.0
    %1066 = vmatpush1.msra.mxu0 0.0
    %1067 = vmatprep.subr.mxu0 0.0
    %1068 = vmatpush1.msra.mxu0 0.0
    %1069 = vmatprep.subr.mxu0 0.0
    %1070 = vmatpush1.msra.mxu0 0.0
    %1071 = vmatprep.subr.mxu0 0.0
    %1072 = vmatpush1.msra.mxu0 0.0
    %1073 = vmatprep.subr.mxu0 0.0
    %1074 = vmatpush1.msra.mxu0 0.0
    %1075 = vmatprep.subr.mxu0 0.0
    %1076 = vmatpush1.msra.mxu0 0.0
    %1077 = vmatprep.subr.mxu0 0.0
    %1078 = vmatpush1.msra.mxu0 0.0
    %1079 = vmatprep.subr.mxu0 0.0
    %1080 = vmatpush1.msra.mxu0 0.0
    %1081 = vmatprep.subr.mxu0 0.0
    %1082 = vmatpush1.msra.mxu0 0.0
    %1083 = vmatprep.subr.mxu0 0.0
    %1084 = vmatpush1.msra.mxu0 0.0
    %1085 = vmatprep.subr.mxu0 0.0
    %1086 = vmatpush1.msra.mxu0 0.0
    %1087 = vmatprep.subr.mxu0 0.0
    %1088 = vmatpush1.msra.mxu0 0.0
    %1089 = vmatprep.subr.mxu0 0.0
    %1090 = vmatpush1.msra.mxu0 0.0
    %1091 = vmatprep.subr.mxu0 0.0
    %1092 = vmatpush1.msra.mxu0 0.0
    %1093 = vmatprep.subr.mxu0 0.0
    %1094 = vmatpush1.msra.mxu0 0.0
    %1095 = vmatprep.subr.mxu0 0.0
    %1096 = vmatpush1.msra.mxu0 0.0
    %1097 = vmatprep.subr.mxu0 0.0
    %1098 = vmatpush1.msra.mxu0 0.0
    %1099 = vmatprep.subr.mxu0 0.0
    %1100 = vmatpush1.msra.mxu0 0.0
    %1101 = vmatprep.subr.mxu0 0.0
    %1102 = vmatpush1.msra.mxu0 0.0
    %1103 = vmatprep.subr.mxu0 0.0
    %1104 = vmatpush1.msra.mxu0 0.0
    %1105 = vmatprep.subr.mxu0 0.0
    %1106 = vmatpush1.msra.mxu0 0.0
    %1107 = vmatprep.subr.mxu0 0.0
    %1108 = vmatpush1.msra.mxu0 0.0
    %1109 = vmatprep.subr.mxu0 0.0
    %1110 = vmatpush1.msra.mxu0 0.0
    %1111 = vmatprep.subr.mxu0 0.0
    %1112 = vmatpush1.msra.mxu0 0.0
    %1113 = vmatprep.subr.mxu0 0.0
    %1114 = vmatpush1.msra.mxu0 0.0
    %1115 = vmatprep.subr.mxu0 0.0
    %1116 = vmatpush1.msra.mxu0 0.0
    %1117 = vmatprep.subr.mxu0 0.0
    %1118 = vmatpush1.msra.mxu0 0.0
    %1119 = vmatprep.subr.mxu0 0.0
    %1120 = vmatpush1.msra.mxu0 0.0
    %1121 = vmatprep.subr.mxu0 0.0
    %1122 = vmatpush1.msra.mxu0 0.0
    %1123 = vmatprep.mubr.f32.mxu0 0.0
    %1124 = vmatmul.mubr.f32.gmra.mrb[0].mxu0 %v560
    %v1125 = vpop.f32.mrb[0].mxu0
    %v1126 = vadd.f32 %v1055, %v1125
    %v1127 = vpop.f32.mrb[0].mxu0
    %v1128 = vadd.f32 %v1057, %v1127
    %1129 = vdwg.mxu0
    %v1130 = vmax.f32 %v842, 0.0
    %v1131 = vmax.f32 %v844, 0.0
    %v1132 = vmax.f32 %v1126, 0.0
    %v1133 = vmax.f32 %v1128, 0.0
    %v1134 = vld [vmem:[#allocation8] sm:$0xff]
    %v1135 = vld [vmem:[#allocation8 + $0x8] sm:$0xff]
    %v1136 = vld [vmem:[#allocation8 + $0x10] sm:$0xff]
    %v1137 = vld [vmem:[#allocation8 + $0x18] sm:$0xff]
    %v1138 = vld [vmem:[#allocation8 + $0x20] sm:$0xff]
    %v1139 = vld [vmem:[#allocation8 + $0x28] sm:$0xff]
    %v1140 = vld [vmem:[#allocation8 + $0x30] sm:$0xff]
    %v1141 = vld [vmem:[#allocation8 + $0x38] sm:$0xff]
    %v1142 = vld [vmem:[#allocation8 + $0x40] sm:$0xff]
    %v1143 = vld [vmem:[#allocation8 + $0x48] sm:$0xff]
    %v1144 = vld [vmem:[#allocation8 + $0x50] sm:$0xff]
    %v1145 = vld [vmem:[#allocation8 + $0x58] sm:$0xff]
    %v1146 = vld [vmem:[#allocation8 + $0x60] sm:$0xff]
    %v1147 = vld [vmem:[#allocation8 + $0x68] sm:$0xff]
    %v1148 = vld [vmem:[#allocation8 + $0x70] sm:$0xff]
    %v1149 = vld [vmem:[#allocation8 + $0x78] sm:$0xff]
    %v1150 = vld [vmem:[#allocation8 + $0x80] sm:$0xff]
    %v1151 = vld [vmem:[#allocation8 + $0x88] sm:$0xff]
    %v1152 = vld [vmem:[#allocation8 + $0x90] sm:$0xff]
    %v1153 = vld [vmem:[#allocation8 + $0x98] sm:$0xff]
    %v1154 = vld [vmem:[#allocation8 + $0xa0] sm:$0xff]
    %v1155 = vld [vmem:[#allocation8 + $0xa8] sm:$0xff]
    %v1156 = vld [vmem:[#allocation8 + $0xb0] sm:$0xff]
    %v1157 = vld [vmem:[#allocation8 + $0xb8] sm:$0xff]
    %v1158 = vld [vmem:[#allocation8 + $0xc0] sm:$0xff]
    %v1159 = vld [vmem:[#allocation8 + $0xc8] sm:$0xff]
    %v1160 = vld [vmem:[#allocation8 + $0xd0] sm:$0xff]
    %v1161 = vld [vmem:[#allocation8 + $0xd8] sm:$0xff]
    %v1162 = vld [vmem:[#allocation8 + $0xe0] sm:$0xff]
    %v1163 = vld [vmem:[#allocation8 + $0xe8] sm:$0xff]
    %v1164 = vld [vmem:[#allocation8 + $0xf0] sm:$0xff]
    %v1165 = vld [vmem:[#allocation8 + $0xf8] sm:$0xff]
    %v1166 = vld [vmem:[#allocation8 + $0x100] sm:$0xff]
    %v1167 = vld [vmem:[#allocation8 + $0x108] sm:$0xff]
    %v1168 = vld [vmem:[#allocation8 + $0x110] sm:$0xff]
    %v1169 = vld [vmem:[#allocation8 + $0x118] sm:$0xff]
    %v1170 = vld [vmem:[#allocation8 + $0x120] sm:$0xff]
    %v1171 = vld [vmem:[#allocation8 + $0x128] sm:$0xff]
    %v1172 = vld [vmem:[#allocation8 + $0x130] sm:$0xff]
    %v1173 = vld [vmem:[#allocation8 + $0x138] sm:$0xff]
    %v1174 = vld [vmem:[#allocation8 + $0x140] sm:$0xff]
    %v1175 = vld [vmem:[#allocation8 + $0x148] sm:$0xff]
    %v1176 = vld [vmem:[#allocation8 + $0x150] sm:$0xff]
    %v1177 = vld [vmem:[#allocation8 + $0x158] sm:$0xff]
    %v1178 = vld [vmem:[#allocation8 + $0x160] sm:$0xff]
    %v1179 = vld [vmem:[#allocation8 + $0x168] sm:$0xff]
    %v1180 = vld [vmem:[#allocation8 + $0x170] sm:$0xff]
    %v1181 = vld [vmem:[#allocation8 + $0x178] sm:$0xff]
    %v1182 = vld [vmem:[#allocation8 + $0x180] sm:$0xff]
    %v1183 = vld [vmem:[#allocation8 + $0x188] sm:$0xff]
    %v1184 = vld [vmem:[#allocation8 + $0x190] sm:$0xff]
    %v1185 = vld [vmem:[#allocation8 + $0x198] sm:$0xff]
    %v1186 = vld [vmem:[#allocation8 + $0x1a0] sm:$0xff]
    %v1187 = vld [vmem:[#allocation8 + $0x1a8] sm:$0xff]
    %v1188 = vld [vmem:[#allocation8 + $0x1b0] sm:$0xff]
    %v1189 = vld [vmem:[#allocation8 + $0x1b8] sm:$0xff]
    %v1190 = vld [vmem:[#allocation8 + $0x1c0] sm:$0xff]
    %v1191 = vld [vmem:[#allocation8 + $0x1c8] sm:$0xff]
    %v1192 = vld [vmem:[#allocation8 + $0x1d0] sm:$0xff]
    %v1193 = vld [vmem:[#allocation8 + $0x1d8] sm:$0xff]
    %v1194 = vld [vmem:[#allocation8 + $0x1e0] sm:$0xff]
    %v1195 = vld [vmem:[#allocation8 + $0x1e8] sm:$0xff]
    %v1196 = vld [vmem:[#allocation8 + $0x1f0] sm:$0xff]
    %v1197 = vld [vmem:[#allocation8 + $0x1f8] sm:$0xff]
    %v1198 = vld [vmem:[#allocation8 + $0x200] sm:$0xff]
    %v1199 = vld [vmem:[#allocation8 + $0x208] sm:$0xff]
    %v1200 = vld [vmem:[#allocation8 + $0x210] sm:$0xff]
    %v1201 = vld [vmem:[#allocation8 + $0x218] sm:$0xff]
    %v1202 = vld [vmem:[#allocation8 + $0x220] sm:$0xff]
    %v1203 = vld [vmem:[#allocation8 + $0x228] sm:$0xff]
    %v1204 = vld [vmem:[#allocation8 + $0x230] sm:$0xff]
    %v1205 = vld [vmem:[#allocation8 + $0x238] sm:$0xff]
    %v1206 = vld [vmem:[#allocation8 + $0x240] sm:$0xff]
    %v1207 = vld [vmem:[#allocation8 + $0x248] sm:$0xff]
    %v1208 = vld [vmem:[#allocation8 + $0x250] sm:$0xff]
    %v1209 = vld [vmem:[#allocation8 + $0x258] sm:$0xff]
    %v1210 = vld [vmem:[#allocation8 + $0x260] sm:$0xff]
    %v1211 = vld [vmem:[#allocation8 + $0x268] sm:$0xff]
    %v1212 = vld [vmem:[#allocation8 + $0x270] sm:$0xff]
    %v1213 = vld [vmem:[#allocation8 + $0x278] sm:$0xff]
    %v1214 = vld [vmem:[#allocation8 + $0x280] sm:$0xff]
    %v1215 = vld [vmem:[#allocation8 + $0x288] sm:$0xff]
    %v1216 = vld [vmem:[#allocation8 + $0x290] sm:$0xff]
    %v1217 = vld [vmem:[#allocation8 + $0x298] sm:$0xff]
    %v1218 = vld [vmem:[#allocation8 + $0x2a0] sm:$0xff]
    %v1219 = vld [vmem:[#allocation8 + $0x2a8] sm:$0xff]
    %v1220 = vld [vmem:[#allocation8 + $0x2b0] sm:$0xff]
    %v1221 = vld [vmem:[#allocation8 + $0x2b8] sm:$0xff]
    %v1222 = vld [vmem:[#allocation8 + $0x2c0] sm:$0xff]
    %v1223 = vld [vmem:[#allocation8 + $0x2c8] sm:$0xff]
    %v1224 = vld [vmem:[#allocation8 + $0x2d0] sm:$0xff]
    %v1225 = vld [vmem:[#allocation8 + $0x2d8] sm:$0xff]
    %v1226 = vld [vmem:[#allocation8 + $0x2e0] sm:$0xff]
    %v1227 = vld [vmem:[#allocation8 + $0x2e8] sm:$0xff]
    %v1228 = vld [vmem:[#allocation8 + $0x2f0] sm:$0xff]
    %v1229 = vld [vmem:[#allocation8 + $0x2f8] sm:$0xff]
    %v1230 = vld [vmem:[#allocation8 + $0x300] sm:$0xff]
    %v1231 = vld [vmem:[#allocation8 + $0x308] sm:$0xff]
    %v1232 = vld [vmem:[#allocation8 + $0x310] sm:$0xff]
    %v1233 = vld [vmem:[#allocation8 + $0x318] sm:$0xff]
    %v1234 = vld [vmem:[#allocation8 + $0x320] sm:$0xff]
    %v1235 = vld [vmem:[#allocation8 + $0x328] sm:$0xff]
    %v1236 = vld [vmem:[#allocation8 + $0x330] sm:$0xff]
    %v1237 = vld [vmem:[#allocation8 + $0x338] sm:$0xff]
    %v1238 = vld [vmem:[#allocation8 + $0x340] sm:$0xff]
    %v1239 = vld [vmem:[#allocation8 + $0x348] sm:$0xff]
    %v1240 = vld [vmem:[#allocation8 + $0x350] sm:$0xff]
    %v1241 = vld [vmem:[#allocation8 + $0x358] sm:$0xff]
    %v1242 = vld [vmem:[#allocation8 + $0x360] sm:$0xff]
    %v1243 = vld [vmem:[#allocation8 + $0x368] sm:$0xff]
    %v1244 = vld [vmem:[#allocation8 + $0x370] sm:$0xff]
    %v1245 = vld [vmem:[#allocation8 + $0x378] sm:$0xff]
    %v1246 = vld [vmem:[#allocation8 + $0x380] sm:$0xff]
    %v1247 = vld [vmem:[#allocation8 + $0x388] sm:$0xff]
    %v1248 = vld [vmem:[#allocation8 + $0x390] sm:$0xff]
    %v1249 = vld [vmem:[#allocation8 + $0x398] sm:$0xff]
    %v1250 = vld [vmem:[#allocation8 + $0x3a0] sm:$0xff]
    %v1251 = vld [vmem:[#allocation8 + $0x3a8] sm:$0xff]
    %v1252 = vld [vmem:[#allocation8 + $0x3b0] sm:$0xff]
    %v1253 = vld [vmem:[#allocation8 + $0x3b8] sm:$0xff]
    %v1254 = vld [vmem:[#allocation8 + $0x3c0] sm:$0xff]
    %v1255 = vld [vmem:[#allocation8 + $0x3c8] sm:$0xff]
    %v1256 = vld [vmem:[#allocation8 + $0x3d0] sm:$0xff]
    %v1257 = vld [vmem:[#allocation8 + $0x3d8] sm:$0xff]
    %v1258 = vld [vmem:[#allocation8 + $0x3e0] sm:$0xff]
    %v1259 = vld [vmem:[#allocation8 + $0x3e8] sm:$0xff]
    %v1260 = vld [vmem:[#allocation8 + $0x3f0] sm:$0xff]
    %v1261 = vld [vmem:[#allocation8 + $0x3f8] sm:$0xff]
    %v1262 = vld [vmem:[#allocation8 + $0x400] sm:$0xff]
    %v1263 = vld [vmem:[#allocation8 + $0x408] sm:$0xff]
    %v1264 = vld [vmem:[#allocation8 + $0x410] sm:$0xff]
    %v1265 = vld [vmem:[#allocation8 + $0x418] sm:$0xff]
    %v1266 = vld [vmem:[#allocation8 + $0x420] sm:$0xff]
    %v1267 = vld [vmem:[#allocation8 + $0x428] sm:$0xff]
    %v1268 = vld [vmem:[#allocation8 + $0x430] sm:$0xff]
    %v1269 = vld [vmem:[#allocation8 + $0x438] sm:$0xff]
    %v1270 = vld [vmem:[#allocation8 + $0x440] sm:$0xff]
    %v1271 = vld [vmem:[#allocation8 + $0x448] sm:$0xff]
    %v1272 = vld [vmem:[#allocation8 + $0x450] sm:$0xff]
    %v1273 = vld [vmem:[#allocation8 + $0x458] sm:$0xff]
    %v1274 = vld [vmem:[#allocation8 + $0x460] sm:$0xff]
    %v1275 = vld [vmem:[#allocation8 + $0x468] sm:$0xff]
    %v1276 = vld [vmem:[#allocation8 + $0x470] sm:$0xff]
    %v1277 = vld [vmem:[#allocation8 + $0x478] sm:$0xff]
    %v1278 = vld [vmem:[#allocation8 + $0x480] sm:$0xff]
    %v1279 = vld [vmem:[#allocation8 + $0x488] sm:$0xff]
    %v1280 = vld [vmem:[#allocation8 + $0x490] sm:$0xff]
    %v1281 = vld [vmem:[#allocation8 + $0x498] sm:$0xff]
    %v1282 = vld [vmem:[#allocation8 + $0x4a0] sm:$0xff]
    %v1283 = vld [vmem:[#allocation8 + $0x4a8] sm:$0xff]
    %v1284 = vld [vmem:[#allocation8 + $0x4b0] sm:$0xff]
    %v1285 = vld [vmem:[#allocation8 + $0x4b8] sm:$0xff]
    %v1286 = vld [vmem:[#allocation8 + $0x4c0] sm:$0xff]
    %v1287 = vld [vmem:[#allocation8 + $0x4c8] sm:$0xff]
    %v1288 = vld [vmem:[#allocation8 + $0x4d0] sm:$0xff]
    %v1289 = vld [vmem:[#allocation8 + $0x4d8] sm:$0xff]
    %v1290 = vld [vmem:[#allocation8 + $0x4e0] sm:$0xff]
    %v1291 = vld [vmem:[#allocation8 + $0x4e8] sm:$0xff]
    %v1292 = vld [vmem:[#allocation8 + $0x4f0] sm:$0xff]
    %v1293 = vld [vmem:[#allocation8 + $0x4f8] sm:$0xff]
    %v1294 = vld [vmem:[#allocation8 + $0x500] sm:$0xff]
    %v1295 = vld [vmem:[#allocation8 + $0x508] sm:$0xff]
    %v1296 = vld [vmem:[#allocation8 + $0x510] sm:$0xff]
    %v1297 = vld [vmem:[#allocation8 + $0x518] sm:$0xff]
    %v1298 = vld [vmem:[#allocation8 + $0x520] sm:$0xff]
    %v1299 = vld [vmem:[#allocation8 + $0x528] sm:$0xff]
    %v1300 = vld [vmem:[#allocation8 + $0x530] sm:$0xff]
    %v1301 = vld [vmem:[#allocation8 + $0x538] sm:$0xff]
    %v1302 = vld [vmem:[#allocation8 + $0x540] sm:$0xff]
    %v1303 = vld [vmem:[#allocation8 + $0x548] sm:$0xff]
    %v1304 = vld [vmem:[#allocation8 + $0x550] sm:$0xff]
    %v1305 = vld [vmem:[#allocation8 + $0x558] sm:$0xff]
    %v1306 = vld [vmem:[#allocation8 + $0x560] sm:$0xff]
    %v1307 = vld [vmem:[#allocation8 + $0x568] sm:$0xff]
    %v1308 = vld [vmem:[#allocation8 + $0x570] sm:$0xff]
    %v1309 = vld [vmem:[#allocation8 + $0x578] sm:$0xff]
    %v1310 = vld [vmem:[#allocation8 + $0x580] sm:$0xff]
    %v1311 = vld [vmem:[#allocation8 + $0x588] sm:$0xff]
    %v1312 = vld [vmem:[#allocation8 + $0x590] sm:$0xff]
    %v1313 = vld [vmem:[#allocation8 + $0x598] sm:$0xff]
    %v1314 = vld [vmem:[#allocation8 + $0x5a0] sm:$0xff]
    %v1315 = vld [vmem:[#allocation8 + $0x5a8] sm:$0xff]
    %v1316 = vld [vmem:[#allocation8 + $0x5b0] sm:$0xff]
    %v1317 = vld [vmem:[#allocation8 + $0x5b8] sm:$0xff]
    %v1318 = vld [vmem:[#allocation8 + $0x5c0] sm:$0xff]
    %v1319 = vld [vmem:[#allocation8 + $0x5c8] sm:$0xff]
    %v1320 = vld [vmem:[#allocation8 + $0x5d0] sm:$0xff]
    %v1321 = vld [vmem:[#allocation8 + $0x5d8] sm:$0xff]
    %v1322 = vld [vmem:[#allocation8 + $0x5e0] sm:$0xff]
    %v1323 = vld [vmem:[#allocation8 + $0x5e8] sm:$0xff]
    %v1324 = vld [vmem:[#allocation8 + $0x5f0] sm:$0xff]
    %v1325 = vld [vmem:[#allocation8 + $0x5f8] sm:$0xff]
    %v1326 = vld [vmem:[#allocation8 + $0x600] sm:$0xff]
    %v1327 = vld [vmem:[#allocation8 + $0x608] sm:$0xff]
    %v1328 = vld [vmem:[#allocation8 + $0x610] sm:$0xff]
    %v1329 = vld [vmem:[#allocation8 + $0x618] sm:$0xff]
    %v1330 = vld [vmem:[#allocation8 + $0x620] sm:$0xff]
    %v1331 = vld [vmem:[#allocation8 + $0x628] sm:$0xff]
    %v1332 = vld [vmem:[#allocation8 + $0x630] sm:$0xff]
    %v1333 = vld [vmem:[#allocation8 + $0x638] sm:$0xff]
    %v1334 = vld [vmem:[#allocation8 + $0x640] sm:$0xff]
    %v1335 = vld [vmem:[#allocation8 + $0x648] sm:$0xff]
    %v1336 = vld [vmem:[#allocation8 + $0x650] sm:$0xff]
    %v1337 = vld [vmem:[#allocation8 + $0x658] sm:$0xff]
    %v1338 = vld [vmem:[#allocation8 + $0x660] sm:$0xff]
    %v1339 = vld [vmem:[#allocation8 + $0x668] sm:$0xff]
    %v1340 = vld [vmem:[#allocation8 + $0x670] sm:$0xff]
    %v1341 = vld [vmem:[#allocation8 + $0x678] sm:$0xff]
    %v1342 = vld [vmem:[#allocation8 + $0x680] sm:$0xff]
    %v1343 = vld [vmem:[#allocation8 + $0x688] sm:$0xff]
    %v1344 = vld [vmem:[#allocation8 + $0x690] sm:$0xff]
    %v1345 = vld [vmem:[#allocation8 + $0x698] sm:$0xff]
    %v1346 = vld [vmem:[#allocation8 + $0x6a0] sm:$0xff]
    %v1347 = vld [vmem:[#allocation8 + $0x6a8] sm:$0xff]
    %v1348 = vld [vmem:[#allocation8 + $0x6b0] sm:$0xff]
    %v1349 = vld [vmem:[#allocation8 + $0x6b8] sm:$0xff]
    %v1350 = vld [vmem:[#allocation8 + $0x6c0] sm:$0xff]
    %v1351 = vld [vmem:[#allocation8 + $0x6c8] sm:$0xff]
    %v1352 = vld [vmem:[#allocation8 + $0x6d0] sm:$0xff]
    %v1353 = vld [vmem:[#allocation8 + $0x6d8] sm:$0xff]
    %v1354 = vld [vmem:[#allocation8 + $0x6e0] sm:$0xff]
    %v1355 = vld [vmem:[#allocation8 + $0x6e8] sm:$0xff]
    %v1356 = vld [vmem:[#allocation8 + $0x6f0] sm:$0xff]
    %v1357 = vld [vmem:[#allocation8 + $0x6f8] sm:$0xff]
    %v1358 = vld [vmem:[#allocation8 + $0x700] sm:$0xff]
    %v1359 = vld [vmem:[#allocation8 + $0x708] sm:$0xff]
    %v1360 = vld [vmem:[#allocation8 + $0x710] sm:$0xff]
    %v1361 = vld [vmem:[#allocation8 + $0x718] sm:$0xff]
    %v1362 = vld [vmem:[#allocation8 + $0x720] sm:$0xff]
    %v1363 = vld [vmem:[#allocation8 + $0x728] sm:$0xff]
    %v1364 = vld [vmem:[#allocation8 + $0x730] sm:$0xff]
    %v1365 = vld [vmem:[#allocation8 + $0x738] sm:$0xff]
    %v1366 = vld [vmem:[#allocation8 + $0x740] sm:$0xff]
    %v1367 = vld [vmem:[#allocation8 + $0x748] sm:$0xff]
    %v1368 = vld [vmem:[#allocation8 + $0x750] sm:$0xff]
    %v1369 = vld [vmem:[#allocation8 + $0x758] sm:$0xff]
    %v1370 = vld [vmem:[#allocation8 + $0x760] sm:$0xff]
    %v1371 = vld [vmem:[#allocation8 + $0x768] sm:$0xff]
    %v1372 = vld [vmem:[#allocation8 + $0x770] sm:$0xff]
    %v1373 = vld [vmem:[#allocation8 + $0x778] sm:$0xff]
    %v1374 = vld [vmem:[#allocation8 + $0x780] sm:$0xff]
    %v1375 = vld [vmem:[#allocation8 + $0x788] sm:$0xff]
    %v1376 = vld [vmem:[#allocation8 + $0x790] sm:$0xff]
    %v1377 = vld [vmem:[#allocation8 + $0x798] sm:$0xff]
    %v1378 = vld [vmem:[#allocation8 + $0x7a0] sm:$0xff]
    %v1379 = vld [vmem:[#allocation8 + $0x7a8] sm:$0xff]
    %v1380 = vld [vmem:[#allocation8 + $0x7b0] sm:$0xff]
    %v1381 = vld [vmem:[#allocation8 + $0x7b8] sm:$0xff]
    %v1382 = vld [vmem:[#allocation8 + $0x7c0] sm:$0xff]
    %v1383 = vld [vmem:[#allocation8 + $0x7c8] sm:$0xff]
    %v1384 = vld [vmem:[#allocation8 + $0x7d0] sm:$0xff]
    %v1385 = vld [vmem:[#allocation8 + $0x7d8] sm:$0xff]
    %v1386 = vld [vmem:[#allocation8 + $0x7e0] sm:$0xff]
    %v1387 = vld [vmem:[#allocation8 + $0x7e8] sm:$0xff]
    %v1388 = vld [vmem:[#allocation8 + $0x7f0] sm:$0xff]
    %v1389 = vld [vmem:[#allocation8 + $0x7f8] sm:$0xff]
    %v1390 = vld [vmem:[#allocation10] sm:$0xf]
    %v1392 = vlaneseq
    %v1393 = vshrl.u32 %v1392, 7
    %v1394 = vsub.s32 0, %v1393
    %v1395 = vrot.slane %v1390, %v1394
    %v1396 = vlaneseq
    %v1397 = vshrl.u32 %v1396, 7
    %v1398 = vsub.s32 1, %v1397
    %v1399 = vrot.slane %v1390, %v1398
    %v1400 = vlaneseq
    %v1401 = vshrl.u32 %v1400, 7
    %v1402 = vsub.s32 2, %v1401
    %v1403 = vrot.slane %v1390, %v1402
    %v1404 = vlaneseq
    %v1405 = vshrl.u32 %v1404, 7
    %v1406 = vsub.s32 3, %v1405
    %v1407 = vrot.slane %v1390, %v1406
    %1412 = vmatprep.subr.mxu0 %v1135
    %1413 = vmatpush1.msra.mxu0 %v1134
    %1414 = vmatprep.subr.mxu0 %v1139
    %1415 = vmatpush1.msra.mxu0 %v1138
    %1416 = vmatprep.subr.mxu0 %v1143
    %1417 = vmatpush1.msra.mxu0 %v1142
    %1418 = vmatprep.subr.mxu0 %v1147
    %1419 = vmatpush1.msra.mxu0 %v1146
    %1420 = vmatprep.subr.mxu0 %v1151
    %1421 = vmatpush1.msra.mxu0 %v1150
    %1422 = vmatprep.subr.mxu0 %v1155
    %1423 = vmatpush1.msra.mxu0 %v1154
    %1424 = vmatprep.subr.mxu0 %v1159
    %1425 = vmatpush1.msra.mxu0 %v1158
    %1426 = vmatprep.subr.mxu0 %v1163
    %1427 = vmatpush1.msra.mxu0 %v1162
    %1428 = vmatprep.subr.mxu0 %v1167
    %1429 = vmatpush1.msra.mxu0 %v1166
    %1430 = vmatprep.subr.mxu0 %v1171
    %1431 = vmatpush1.msra.mxu0 %v1170
    %1432 = vmatprep.subr.mxu0 %v1175
    %1433 = vmatpush1.msra.mxu0 %v1174
    %1434 = vmatprep.subr.mxu0 %v1179
    %1435 = vmatpush1.msra.mxu0 %v1178
    %1436 = vmatprep.subr.mxu0 %v1183
    %1437 = vmatpush1.msra.mxu0 %v1182
    %1438 = vmatprep.subr.mxu0 %v1187
    %1439 = vmatpush1.msra.mxu0 %v1186
    %1440 = vmatprep.subr.mxu0 %v1191
    %1441 = vmatpush1.msra.mxu0 %v1190
    %1442 = vmatprep.subr.mxu0 %v1195
    %1443 = vmatpush1.msra.mxu0 %v1194
    %1444 = vmatprep.subr.mxu0 %v1199
    %1445 = vmatpush1.msra.mxu0 %v1198
    %1446 = vmatprep.subr.mxu0 %v1203
    %1447 = vmatpush1.msra.mxu0 %v1202
    %1448 = vmatprep.subr.mxu0 %v1207
    %1449 = vmatpush1.msra.mxu0 %v1206
    %1450 = vmatprep.subr.mxu0 %v1211
    %1451 = vmatpush1.msra.mxu0 %v1210
    %1452 = vmatprep.subr.mxu0 %v1215
    %1453 = vmatpush1.msra.mxu0 %v1214
    %1454 = vmatprep.subr.mxu0 %v1219
    %1455 = vmatpush1.msra.mxu0 %v1218
    %1456 = vmatprep.subr.mxu0 %v1223
    %1457 = vmatpush1.msra.mxu0 %v1222
    %1458 = vmatprep.subr.mxu0 %v1227
    %1459 = vmatpush1.msra.mxu0 %v1226
    %1460 = vmatprep.subr.mxu0 %v1231
    %1461 = vmatpush1.msra.mxu0 %v1230
    %1462 = vmatprep.subr.mxu0 %v1235
    %1463 = vmatpush1.msra.mxu0 %v1234
    %1464 = vmatprep.subr.mxu0 %v1239
    %1465 = vmatpush1.msra.mxu0 %v1238
    %1466 = vmatprep.subr.mxu0 %v1243
    %1467 = vmatpush1.msra.mxu0 %v1242
    %1468 = vmatprep.subr.mxu0 %v1247
    %1469 = vmatpush1.msra.mxu0 %v1246
    %1470 = vmatprep.subr.mxu0 %v1251
    %1471 = vmatpush1.msra.mxu0 %v1250
    %1472 = vmatprep.subr.mxu0 %v1255
    %1473 = vmatpush1.msra.mxu0 %v1254
    %1474 = vmatprep.subr.mxu0 %v1259
    %1475 = vmatpush1.msra.mxu0 %v1258
    %1476 = vmatprep.mubr.f32.mxu0 %v1131
    %1477 = vmatmul.mubr.f32.gmra.mrb[0].mxu0 %v1130
    %v1478 = vpop.f32.mrb[0].mxu0
    %v1479 = vadd.f32 %v1395, %v1478
    %v1480 = vpop.f32.mrb[0].mxu0
    %v1481 = vadd.f32 %v1399, %v1480
    %1482 = vdwg.mxu0
    %1483 = vmatprep.subr.mxu0 %v1263
    %1484 = vmatpush1.msra.mxu0 %v1262
    %1485 = vmatprep.subr.mxu0 %v1267
    %1486 = vmatpush1.msra.mxu0 %v1266
    %1487 = vmatprep.subr.mxu0 %v1271
    %1488 = vmatpush1.msra.mxu0 %v1270
    %1489 = vmatprep.subr.mxu0 %v1275
    %1490 = vmatpush1.msra.mxu0 %v1274
    %1491 = vmatprep.subr.mxu0 %v1279
    %1492 = vmatpush1.msra.mxu0 %v1278
    %1493 = vmatprep.subr.mxu0 %v1283
    %1494 = vmatpush1.msra.mxu0 %v1282
    %1495 = vmatprep.subr.mxu0 %v1287
    %1496 = vmatpush1.msra.mxu0 %v1286
    %1497 = vmatprep.subr.mxu0 %v1291
    %1498 = vmatpush1.msra.mxu0 %v1290
    %1499 = vmatprep.subr.mxu0 %v1295
    %1500 = vmatpush1.msra.mxu0 %v1294
    %1501 = vmatprep.subr.mxu0 %v1299
    %1502 = vmatpush1.msra.mxu0 %v1298
    %1503 = vmatprep.subr.mxu0 %v1303
    %1504 = vmatpush1.msra.mxu0 %v1302
    %1505 = vmatprep.subr.mxu0 %v1307
    %1506 = vmatpush1.msra.mxu0 %v1306
    %1507 = vmatprep.subr.mxu0 %v1311
    %1508 = vmatpush1.msra.mxu0 %v1310
    %1509 = vmatprep.subr.mxu0 %v1315
    %1510 = vmatpush1.msra.mxu0 %v1314
    %1511 = vmatprep.subr.mxu0 %v1319
    %1512 = vmatpush1.msra.mxu0 %v1318
    %1513 = vmatprep.subr.mxu0 %v1323
    %1514 = vmatpush1.msra.mxu0 %v1322
    %1515 = vmatprep.subr.mxu0 %v1327
    %1516 = vmatpush1.msra.mxu0 %v1326
    %1517 = vmatprep.subr.mxu0 %v1331
    %1518 = vmatpush1.msra.mxu0 %v1330
    %1519 = vmatprep.subr.mxu0 %v1335
    %1520 = vmatpush1.msra.mxu0 %v1334
    %1521 = vmatprep.subr.mxu0 %v1339
    %1522 = vmatpush1.msra.mxu0 %v1338
    %1523 = vmatprep.subr.mxu0 %v1343
    %1524 = vmatpush1.msra.mxu0 %v1342
    %1525 = vmatprep.subr.mxu0 %v1347
    %1526 = vmatpush1.msra.mxu0 %v1346
    %1527 = vmatprep.subr.mxu0 %v1351
    %1528 = vmatpush1.msra.mxu0 %v1350
    %1529 = vmatprep.subr.mxu0 %v1355
    %1530 = vmatpush1.msra.mxu0 %v1354
    %1531 = vmatprep.subr.mxu0 %v1359
    %1532 = vmatpush1.msra.mxu0 %v1358
    %1533 = vmatprep.subr.mxu0 %v1363
    %1534 = vmatpush1.msra.mxu0 %v1362
    %1535 = vmatprep.subr.mxu0 %v1367
    %1536 = vmatpush1.msra.mxu0 %v1366
    %1537 = vmatprep.subr.mxu0 %v1371
    %1538 = vmatpush1.msra.mxu0 %v1370
    %1539 = vmatprep.subr.mxu0 %v1375
    %1540 = vmatpush1.msra.mxu0 %v1374
    %1541 = vmatprep.subr.mxu0 %v1379
    %1542 = vmatpush1.msra.mxu0 %v1378
    %1543 = vmatprep.subr.mxu0 %v1383
    %1544 = vmatpush1.msra.mxu0 %v1382
    %1545 = vmatprep.subr.mxu0 %v1387
    %1546 = vmatpush1.msra.mxu0 %v1386
    %1547 = vmatprep.mubr.f32.mxu0 %v1133
    %1548 = vmatmul.mubr.f32.gmra.mrb[0].mxu0 %v1132
    %v1549 = vpop.f32.mrb[0].mxu0
    %v1550 = vadd.f32 %v1479, %v1549
    %v1551 = vpop.f32.mrb[0].mxu0
    %v1552 = vadd.f32 %v1481, %v1551
    %1553 = vdwg.mxu0
    %1554 = vmatprep.subr.mxu0 %v1137
    %1555 = vmatpush1.msra.mxu0 %v1136
    %1556 = vmatprep.subr.mxu0 %v1141
    %1557 = vmatpush1.msra.mxu0 %v1140
    %1558 = vmatprep.subr.mxu0 %v1145
    %1559 = vmatpush1.msra.mxu0 %v1144
    %1560 = vmatprep.subr.mxu0 %v1149
    %1561 = vmatpush1.msra.mxu0 %v1148
    %1562 = vmatprep.subr.mxu0 %v1153
    %1563 = vmatpush1.msra.mxu0 %v1152
    %1564 = vmatprep.subr.mxu0 %v1157
    %1565 = vmatpush1.msra.mxu0 %v1156
    %1566 = vmatprep.subr.mxu0 %v1161
    %1567 = vmatpush1.msra.mxu0 %v1160
    %1568 = vmatprep.subr.mxu0 %v1165
    %1569 = vmatpush1.msra.mxu0 %v1164
    %1570 = vmatprep.subr.mxu0 %v1169
    %1571 = vmatpush1.msra.mxu0 %v1168
    %1572 = vmatprep.subr.mxu0 %v1173
    %1573 = vmatpush1.msra.mxu0 %v1172
    %1574 = vmatprep.subr.mxu0 %v1177
    %1575 = vmatpush1.msra.mxu0 %v1176
    %1576 = vmatprep.subr.mxu0 %v1181
    %1577 = vmatpush1.msra.mxu0 %v1180
    %1578 = vmatprep.subr.mxu0 %v1185
    %1579 = vmatpush1.msra.mxu0 %v1184
    %1580 = vmatprep.subr.mxu0 %v1189
    %1581 = vmatpush1.msra.mxu0 %v1188
    %1582 = vmatprep.subr.mxu0 %v1193
    %1583 = vmatpush1.msra.mxu0 %v1192
    %1584 = vmatprep.subr.mxu0 %v1197
    %1585 = vmatpush1.msra.mxu0 %v1196
    %1586 = vmatprep.subr.mxu0 %v1201
    %1587 = vmatpush1.msra.mxu0 %v1200
    %1588 = vmatprep.subr.mxu0 %v1205
    %1589 = vmatpush1.msra.mxu0 %v1204
    %1590 = vmatprep.subr.mxu0 %v1209
    %1591 = vmatpush1.msra.mxu0 %v1208
    %1592 = vmatprep.subr.mxu0 %v1213
    %1593 = vmatpush1.msra.mxu0 %v1212
    %1594 = vmatprep.subr.mxu0 %v1217
    %1595 = vmatpush1.msra.mxu0 %v1216
    %1596 = vmatprep.subr.mxu0 %v1221
    %1597 = vmatpush1.msra.mxu0 %v1220
    %1598 = vmatprep.subr.mxu0 %v1225
    %1599 = vmatpush1.msra.mxu0 %v1224
    %1600 = vmatprep.subr.mxu0 %v1229
    %1601 = vmatpush1.msra.mxu0 %v1228
    %1602 = vmatprep.subr.mxu0 %v1233
    %1603 = vmatpush1.msra.mxu0 %v1232
    %1604 = vmatprep.subr.mxu0 %v1237
    %1605 = vmatpush1.msra.mxu0 %v1236
    %1606 = vmatprep.subr.mxu0 %v1241
    %1607 = vmatpush1.msra.mxu0 %v1240
    %1608 = vmatprep.subr.mxu0 %v1245
    %1609 = vmatpush1.msra.mxu0 %v1244
    %1610 = vmatprep.subr.mxu0 %v1249
    %1611 = vmatpush1.msra.mxu0 %v1248
    %1612 = vmatprep.subr.mxu0 %v1253
    %1613 = vmatpush1.msra.mxu0 %v1252
    %1614 = vmatprep.subr.mxu0 %v1257
    %1615 = vmatpush1.msra.mxu0 %v1256
    %1616 = vmatprep.subr.mxu0 %v1261
    %1617 = vmatpush1.msra.mxu0 %v1260
    %1618 = vmatprep.mubr.f32.mxu0 %v1131
    %1619 = vmatmul.mubr.f32.gmra.mrb[0].mxu0 %v1130
    %v1620 = vpop.f32.mrb[0].mxu0
    %v1621 = vadd.f32 %v1403, %v1620
    %v1622 = vpop.f32.mrb[0].mxu0
    %v1623 = vadd.f32 %v1407, %v1622
    %1624 = vdwg.mxu0
    %1625 = vmatprep.subr.mxu0 %v1265
    %1626 = vmatpush1.msra.mxu0 %v1264
    %1627 = vmatprep.subr.mxu0 %v1269
    %1628 = vmatpush1.msra.mxu0 %v1268
    %1629 = vmatprep.subr.mxu0 %v1273
    %1630 = vmatpush1.msra.mxu0 %v1272
    %1631 = vmatprep.subr.mxu0 %v1277
    %1632 = vmatpush1.msra.mxu0 %v1276
    %1633 = vmatprep.subr.mxu0 %v1281
    %1634 = vmatpush1.msra.mxu0 %v1280
    %1635 = vmatprep.subr.mxu0 %v1285
    %1636 = vmatpush1.msra.mxu0 %v1284
    %1637 = vmatprep.subr.mxu0 %v1289
    %1638 = vmatpush1.msra.mxu0 %v1288
    %1639 = vmatprep.subr.mxu0 %v1293
    %1640 = vmatpush1.msra.mxu0 %v1292
    %1641 = vmatprep.subr.mxu0 %v1297
    %1642 = vmatpush1.msra.mxu0 %v1296
    %1643 = vmatprep.subr.mxu0 %v1301
    %1644 = vmatpush1.msra.mxu0 %v1300
    %1645 = vmatprep.subr.mxu0 %v1305
    %1646 = vmatpush1.msra.mxu0 %v1304
    %1647 = vmatprep.subr.mxu0 %v1309
    %1648 = vmatpush1.msra.mxu0 %v1308
    %1649 = vmatprep.subr.mxu0 %v1313
    %1650 = vmatpush1.msra.mxu0 %v1312
    %1651 = vmatprep.subr.mxu0 %v1317
    %1652 = vmatpush1.msra.mxu0 %v1316
    %1653 = vmatprep.subr.mxu0 %v1321
    %1654 = vmatpush1.msra.mxu0 %v1320
    %1655 = vmatprep.subr.mxu0 %v1325
    %1656 = vmatpush1.msra.mxu0 %v1324
    %1657 = vmatprep.subr.mxu0 %v1329
    %1658 = vmatpush1.msra.mxu0 %v1328
    %1659 = vmatprep.subr.mxu0 %v1333
    %1660 = vmatpush1.msra.mxu0 %v1332
    %1661 = vmatprep.subr.mxu0 %v1337
    %1662 = vmatpush1.msra.mxu0 %v1336
    %1663 = vmatprep.subr.mxu0 %v1341
    %1664 = vmatpush1.msra.mxu0 %v1340
    %1665 = vmatprep.subr.mxu0 %v1345
    %1666 = vmatpush1.msra.mxu0 %v1344
    %1667 = vmatprep.subr.mxu0 %v1349
    %1668 = vmatpush1.msra.mxu0 %v1348
    %1669 = vmatprep.subr.mxu0 %v1353
    %1670 = vmatpush1.msra.mxu0 %v1352
    %1671 = vmatprep.subr.mxu0 %v1357
    %1672 = vmatpush1.msra.mxu0 %v1356
    %1673 = vmatprep.subr.mxu0 %v1361
    %1674 = vmatpush1.msra.mxu0 %v1360
    %1675 = vmatprep.subr.mxu0 %v1365
    %1676 = vmatpush1.msra.mxu0 %v1364
    %1677 = vmatprep.subr.mxu0 %v1369
    %1678 = vmatpush1.msra.mxu0 %v1368
    %1679 = vmatprep.subr.mxu0 %v1373
    %1680 = vmatpush1.msra.mxu0 %v1372
    %1681 = vmatprep.subr.mxu0 %v1377
    %1682 = vmatpush1.msra.mxu0 %v1376
    %1683 = vmatprep.subr.mxu0 %v1381
    %1684 = vmatpush1.msra.mxu0 %v1380
    %1685 = vmatprep.subr.mxu0 %v1385
    %1686 = vmatpush1.msra.mxu0 %v1384
    %1687 = vmatprep.subr.mxu0 %v1389
    %1688 = vmatpush1.msra.mxu0 %v1388
    %1689 = vmatprep.mubr.f32.mxu0 %v1133
    %1690 = vmatmul.mubr.f32.gmra.mrb[0].mxu0 %v1132
    %v1691 = vpop.f32.mrb[0].mxu0
    %v1692 = vadd.f32 %v1621, %v1691
    %v1693 = vpop.f32.mrb[0].mxu0
    %v1694 = vadd.f32 %v1623, %v1693
    %1695 = vdwg.mxu0
    %v1696 = vmax.f32 %v1550, 0.0
    %v1697 = vmax.f32 %v1552, 0.0
    %v1698 = vmax.f32 %v1692, 0.0
    %v1699 = vmax.f32 %v1694, 0.0
    %v1700 = vld [vmem:[#allocation11] sm:$0xff]
    %v1701 = vld [vmem:[#allocation11 + $0x8] sm:$0xff]
    %v1702 = vld [vmem:[#allocation11 + $0x10] sm:$0xff]
    %v1703 = vld [vmem:[#allocation11 + $0x18] sm:$0xff]
    %v1704 = vld [vmem:[#allocation11 + $0x20] sm:$0xff]
    %v1705 = vld [vmem:[#allocation11 + $0x28] sm:$0xff]
    %v1706 = vld [vmem:[#allocation11 + $0x30] sm:$0xff]
    %v1707 = vld [vmem:[#allocation11 + $0x38] sm:$0xff]
    %v1708 = vld [vmem:[#allocation11 + $0x40] sm:$0xff]
    %v1709 = vld [vmem:[#allocation11 + $0x48] sm:$0xff]
    %v1710 = vld [vmem:[#allocation11 + $0x50] sm:$0xff]
    %v1711 = vld [vmem:[#allocation11 + $0x58] sm:$0xff]
    %v1712 = vld [vmem:[#allocation11 + $0x60] sm:$0xff]
    %v1713 = vld [vmem:[#allocation11 + $0x68] sm:$0xff]
    %v1714 = vld [vmem:[#allocation11 + $0x70] sm:$0xff]
    %v1715 = vld [vmem:[#allocation11 + $0x78] sm:$0xff]
    %v1716 = vld [vmem:[#allocation11 + $0x80] sm:$0xff]
    %v1717 = vld [vmem:[#allocation11 + $0x88] sm:$0xff]
    %v1718 = vld [vmem:[#allocation11 + $0x90] sm:$0xff]
    %v1719 = vld [vmem:[#allocation11 + $0x98] sm:$0xff]
    %v1720 = vld [vmem:[#allocation11 + $0xa0] sm:$0xff]
    %v1721 = vld [vmem:[#allocation11 + $0xa8] sm:$0xff]
    %v1722 = vld [vmem:[#allocation11 + $0xb0] sm:$0xff]
    %v1723 = vld [vmem:[#allocation11 + $0xb8] sm:$0xff]
    %v1724 = vld [vmem:[#allocation11 + $0xc0] sm:$0xff]
    %v1725 = vld [vmem:[#allocation11 + $0xc8] sm:$0xff]
    %v1726 = vld [vmem:[#allocation11 + $0xd0] sm:$0xff]
    %v1727 = vld [vmem:[#allocation11 + $0xd8] sm:$0xff]
    %v1728 = vld [vmem:[#allocation11 + $0xe0] sm:$0xff]
    %v1729 = vld [vmem:[#allocation11 + $0xe8] sm:$0xff]
    %v1730 = vld [vmem:[#allocation11 + $0xf0] sm:$0xff]
    %v1731 = vld [vmem:[#allocation11 + $0xf8] sm:$0xff]
    %v1732 = vld [vmem:[#allocation11 + $0x100] sm:$0xff]
    %v1733 = vld [vmem:[#allocation11 + $0x108] sm:$0xff]
    %v1734 = vld [vmem:[#allocation11 + $0x110] sm:$0xff]
    %v1735 = vld [vmem:[#allocation11 + $0x118] sm:$0xff]
    %v1736 = vld [vmem:[#allocation11 + $0x120] sm:$0xff]
    %v1737 = vld [vmem:[#allocation11 + $0x128] sm:$0xff]
    %v1738 = vld [vmem:[#allocation11 + $0x130] sm:$0xff]
    %v1739 = vld [vmem:[#allocation11 + $0x138] sm:$0xff]
    %v1740 = vld [vmem:[#allocation11 + $0x140] sm:$0xff]
    %v1741 = vld [vmem:[#allocation11 + $0x148] sm:$0xff]
    %v1742 = vld [vmem:[#allocation11 + $0x150] sm:$0xff]
    %v1743 = vld [vmem:[#allocation11 + $0x158] sm:$0xff]
    %v1744 = vld [vmem:[#allocation11 + $0x160] sm:$0xff]
    %v1745 = vld [vmem:[#allocation11 + $0x168] sm:$0xff]
    %v1746 = vld [vmem:[#allocation11 + $0x170] sm:$0xff]
    %v1747 = vld [vmem:[#allocation11 + $0x178] sm:$0xff]
    %v1748 = vld [vmem:[#allocation11 + $0x180] sm:$0xff]
    %v1749 = vld [vmem:[#allocation11 + $0x188] sm:$0xff]
    %v1750 = vld [vmem:[#allocation11 + $0x190] sm:$0xff]
    %v1751 = vld [vmem:[#allocation11 + $0x198] sm:$0xff]
    %v1752 = vld [vmem:[#allocation11 + $0x1a0] sm:$0xff]
    %v1753 = vld [vmem:[#allocation11 + $0x1a8] sm:$0xff]
    %v1754 = vld [vmem:[#allocation11 + $0x1b0] sm:$0xff]
    %v1755 = vld [vmem:[#allocation11 + $0x1b8] sm:$0xff]
    %v1756 = vld [vmem:[#allocation11 + $0x1c0] sm:$0xff]
    %v1757 = vld [vmem:[#allocation11 + $0x1c8] sm:$0xff]
    %v1758 = vld [vmem:[#allocation11 + $0x1d0] sm:$0xff]
    %v1759 = vld [vmem:[#allocation11 + $0x1d8] sm:$0xff]
    %v1760 = vld [vmem:[#allocation11 + $0x1e0] sm:$0xff]
    %v1761 = vld [vmem:[#allocation11 + $0x1e8] sm:$0xff]
    %v1762 = vld [vmem:[#allocation11 + $0x1f0] sm:$0xff]
    %v1763 = vld [vmem:[#allocation11 + $0x1f8] sm:$0xff]
    %v1764 = vld [vmem:[#allocation13] sm:$0x1]
    %v1766 = vlaneseq
    %v1767 = vshrl.u32 %v1766, 7
    %v1768 = vsub.s32 0, %v1767
    %v1769 = vrot.slane %v1764, %v1768
    %1771 = vmatprep.subr.mxu0 0.0
    %1772 = vmatpush1.msra.mxu0 %v1700
    %1773 = vmatprep.subr.mxu0 0.0
    %1774 = vmatpush1.msra.mxu0 %v1701
    %1775 = vmatprep.subr.mxu0 0.0
    %1776 = vmatpush1.msra.mxu0 %v1702
    %1777 = vmatprep.subr.mxu0 0.0
    %1778 = vmatpush1.msra.mxu0 %v1703
    %1779 = vmatprep.subr.mxu0 0.0
    %1780 = vmatpush1.msra.mxu0 %v1704
    %1781 = vmatprep.subr.mxu0 0.0
    %1782 = vmatpush1.msra.mxu0 %v1705
    %1783 = vmatprep.subr.mxu0 0.0
    %1784 = vmatpush1.msra.mxu0 %v1706
    %1785 = vmatprep.subr.mxu0 0.0
    %1786 = vmatpush1.msra.mxu0 %v1707
    %1787 = vmatprep.subr.mxu0 0.0
    %1788 = vmatpush1.msra.mxu0 %v1708
    %1789 = vmatprep.subr.mxu0 0.0
    %1790 = vmatpush1.msra.mxu0 %v1709
    %1791 = vmatprep.subr.mxu0 0.0
    %1792 = vmatpush1.msra.mxu0 %v1710
    %1793 = vmatprep.subr.mxu0 0.0
    %1794 = vmatpush1.msra.mxu0 %v1711
    %1795 = vmatprep.subr.mxu0 0.0
    %1796 = vmatpush1.msra.mxu0 %v1712
    %1797 = vmatprep.subr.mxu0 0.0
    %1798 = vmatpush1.msra.mxu0 %v1713
    %1799 = vmatprep.subr.mxu0 0.0
    %1800 = vmatpush1.msra.mxu0 %v1714
    %1801 = vmatprep.subr.mxu0 0.0
    %1802 = vmatpush1.msra.mxu0 %v1715
    %1803 = vmatprep.subr.mxu0 0.0
    %1804 = vmatpush1.msra.mxu0 %v1716
    %1805 = vmatprep.subr.mxu0 0.0
    %1806 = vmatpush1.msra.mxu0 %v1717
    %1807 = vmatprep.subr.mxu0 0.0
    %1808 = vmatpush1.msra.mxu0 %v1718
    %1809 = vmatprep.subr.mxu0 0.0
    %1810 = vmatpush1.msra.mxu0 %v1719
    %1811 = vmatprep.subr.mxu0 0.0
    %1812 = vmatpush1.msra.mxu0 %v1720
    %1813 = vmatprep.subr.mxu0 0.0
    %1814 = vmatpush1.msra.mxu0 %v1721
    %1815 = vmatprep.subr.mxu0 0.0
    %1816 = vmatpush1.msra.mxu0 %v1722
    %1817 = vmatprep.subr.mxu0 0.0
    %1818 = vmatpush1.msra.mxu0 %v1723
    %1819 = vmatprep.subr.mxu0 0.0
    %1820 = vmatpush1.msra.mxu0 %v1724
    %1821 = vmatprep.subr.mxu0 0.0
    %1822 = vmatpush1.msra.mxu0 %v1725
    %1823 = vmatprep.subr.mxu0 0.0
    %1824 = vmatpush1.msra.mxu0 %v1726
    %1825 = vmatprep.subr.mxu0 0.0
    %1826 = vmatpush1.msra.mxu0 %v1727
    %1827 = vmatprep.subr.mxu0 0.0
    %1828 = vmatpush1.msra.mxu0 %v1728
    %1829 = vmatprep.subr.mxu0 0.0
    %1830 = vmatpush1.msra.mxu0 %v1729
    %1831 = vmatprep.subr.mxu0 0.0
    %1832 = vmatpush1.msra.mxu0 %v1730
    %1833 = vmatprep.subr.mxu0 0.0
    %1834 = vmatpush1.msra.mxu0 %v1731
    %1835 = vmatprep.mubr.f32.mxu0 %v1697
    %1836 = vmatmul.mubr.f32.gmra.mrb[0].mxu0 %v1696
    %v1837 = vpop.f32.mrb[0].mxu0
    %v1838 = vadd.f32 %v1769, %v1837
    %v1839 = vpop.f32.mrb[0].mxu0
    %1840 = vdwg.mxu0
    %1841 = vmatprep.subr.mxu0 0.0
    %1842 = vmatpush1.msra.mxu0 %v1732
    %1843 = vmatprep.subr.mxu0 0.0
    %1844 = vmatpush1.msra.mxu0 %v1733
    %1845 = vmatprep.subr.mxu0 0.0
    %1846 = vmatpush1.msra.mxu0 %v1734
    %1847 = vmatprep.subr.mxu0 0.0
    %1848 = vmatpush1.msra.mxu0 %v1735
    %1849 = vmatprep.subr.mxu0 0.0
    %1850 = vmatpush1.msra.mxu0 %v1736
    %1851 = vmatprep.subr.mxu0 0.0
    %1852 = vmatpush1.msra.mxu0 %v1737
    %1853 = vmatprep.subr.mxu0 0.0
    %1854 = vmatpush1.msra.mxu0 %v1738
    %1855 = vmatprep.subr.mxu0 0.0
    %1856 = vmatpush1.msra.mxu0 %v1739
    %1857 = vmatprep.subr.mxu0 0.0
    %1858 = vmatpush1.msra.mxu0 %v1740
    %1859 = vmatprep.subr.mxu0 0.0
    %1860 = vmatpush1.msra.mxu0 %v1741
    %1861 = vmatprep.subr.mxu0 0.0
    %1862 = vmatpush1.msra.mxu0 %v1742
    %1863 = vmatprep.subr.mxu0 0.0
    %1864 = vmatpush1.msra.mxu0 %v1743
    %1865 = vmatprep.subr.mxu0 0.0
    %1866 = vmatpush1.msra.mxu0 %v1744
    %1867 = vmatprep.subr.mxu0 0.0
    %1868 = vmatpush1.msra.mxu0 %v1745
    %1869 = vmatprep.subr.mxu0 0.0
    %1870 = vmatpush1.msra.mxu0 %v1746
    %1871 = vmatprep.subr.mxu0 0.0
    %1872 = vmatpush1.msra.mxu0 %v1747
    %1873 = vmatprep.subr.mxu0 0.0
    %1874 = vmatpush1.msra.mxu0 %v1748
    %1875 = vmatprep.subr.mxu0 0.0
    %1876 = vmatpush1.msra.mxu0 %v1749
    %1877 = vmatprep.subr.mxu0 0.0
    %1878 = vmatpush1.msra.mxu0 %v1750
    %1879 = vmatprep.subr.mxu0 0.0
    %1880 = vmatpush1.msra.mxu0 %v1751
    %1881 = vmatprep.subr.mxu0 0.0
    %1882 = vmatpush1.msra.mxu0 %v1752
    %1883 = vmatprep.subr.mxu0 0.0
    %1884 = vmatpush1.msra.mxu0 %v1753
    %1885 = vmatprep.subr.mxu0 0.0
    %1886 = vmatpush1.msra.mxu0 %v1754
    %1887 = vmatprep.subr.mxu0 0.0
    %1888 = vmatpush1.msra.mxu0 %v1755
    %1889 = vmatprep.subr.mxu0 0.0
    %1890 = vmatpush1.msra.mxu0 %v1756
    %1891 = vmatprep.subr.mxu0 0.0
    %1892 = vmatpush1.msra.mxu0 %v1757
    %1893 = vmatprep.subr.mxu0 0.0
    %1894 = vmatpush1.msra.mxu0 %v1758
    %1895 = vmatprep.subr.mxu0 0.0
    %1896 = vmatpush1.msra.mxu0 %v1759
    %1897 = vmatprep.subr.mxu0 0.0
    %1898 = vmatpush1.msra.mxu0 %v1760
    %1899 = vmatprep.subr.mxu0 0.0
    %1900 = vmatpush1.msra.mxu0 %v1761
    %1901 = vmatprep.subr.mxu0 0.0
    %1902 = vmatpush1.msra.mxu0 %v1762
    %1903 = vmatprep.subr.mxu0 0.0
    %1904 = vmatpush1.msra.mxu0 %v1763
    %1905 = vmatprep.mubr.f32.mxu0 %v1699
    %1906 = vmatmul.mubr.f32.gmra.mrb[0].mxu0 %v1698
    %v1907 = vpop.f32.mrb[0].mxu0
    %v1908 = vadd.f32 %v1838, %v1907
    %v1909 = vpop.f32.mrb[0].mxu0
    %1910 = vdwg.mxu0
    %1911 = vst [vmem:[#allocation14] sm:$0xff] %v1908
    // Predicated region
    $region58: #{tpu_custom_call.1} parent=1 // pred_check
      _
    $region59: #{tpu_custom_call.1} parent=1 // pred_check_branch
      %1913 = sbr.rel (0) target = $region61
    $region60: #{tpu_custom_call.1} parent=1 // pred_region
      %s1915 = ssub.s32 128, 64
      %1916 = vsyncadd [#allocation4], %s1915
      %s1917 = sshll.u32 [#allocation14], 4
      %s1918 = int_to_ptr.vmem [resolvable:$true] %s1917
      %1923 = dma.vmem_to_hbm [thread:$0]  %s1918, 64, %s7, [#allocation4], 64, 64, 4
    $region61: #{tpu_custom_call.1} parent=1 // pred_fallthru
      _
    // Predicated region
    $region62: #{tpu_custom_call.1} parent=1 // pred_check
      _
    $region63: #{tpu_custom_call.1} parent=1 // pred_check_branch
      %1925 = sbr.rel (0) target = $region65
    $region64: #{tpu_custom_call.1} parent=1 // pred_region
      %1926 = dma.done [#allocation4], 128
    $region65: #{tpu_custom_call.1} parent=1 // pred_fallthru
      _
    %1927 = vsyncpa [#allocation3], 1
    %1928 = vsyncpa [#allocation6], 1
    %1929 = vsyncpa [#allocation9], 1
    %1930 = vsyncpa [#allocation12], 1
    %1931 = vsyncpa [#allocation4], 1

</llo_original>
